<compile_context>
chip_gen: v7x
topology: tpu7x:2x2x1
jax: 0.10.0
libtpu: 0.0.40
codegen_flags: <defaults>
</compile_context>

<pallas_src>
import math
import functools

import jax
import jax.numpy as jnp
from jax import lax
from jax.experimental import pallas as pl
from jax.experimental.pallas import tpu as pltpu

D_MODEL = 32
NUM_HEADS = 4
D_HEAD = D_MODEL // NUM_HEADS
LN_EPS = 1e-5


# ---------------------------------------------------------------------------
# Positional encoding (sinusoidal, as in the Conformer RelPositionalEncoding)
# ---------------------------------------------------------------------------
def sinusoid_pe(T, D):
    position = jnp.arange(T, dtype=jnp.float32)[:, None]
    div_term = jnp.exp(
        jnp.arange(0, D, 2, dtype=jnp.float32) * (-math.log(10000.0) / D)
    )
    pe = jnp.zeros((T, D), dtype=jnp.float32)
    pe = pe.at[:, 0::2].set(jnp.sin(position * div_term))
    pe = pe.at[:, 1::2].set(jnp.cos(position * div_term))
    return pe


# ---------------------------------------------------------------------------
# Wrapper-side (batch-invariant, hoisted) coefficient matrix that folds the
# positional projection AND the pad+view relative shift into one matmul RHS.
#
#   pos[b,h,i,j] = [j<=i]  * sum_{d in head h} qv[b,i,  d] * pp[T-1-i+j, d]
#                + [j>=i+2]* sum_{d in head h} qv[b,i+1, d] * pp[j-i-2,  d]
#
# cflat[(i*2D + branch*D + d), (h*T + j)] holds the pp coefficient for the
# (branch, i, d, h, j) combination; branch 0 pairs with qv row i, branch 1
# pairs with qv row i+1 (qv_up).
# ---------------------------------------------------------------------------
def _pos_shift_coeff(pp, T, D, H, dh):
    ii = jnp.arange(T).reshape(T, 1, 1, 1)          # query row i
    dd = jnp.arange(D).reshape(1, D, 1, 1)          # feature d
    hh = jnp.arange(H).reshape(1, 1, H, 1)          # head h
    jj = jnp.arange(T).reshape(1, 1, 1, T)          # key col j
    in_head = (dd // dh) == hh                       # (1,D,H,1)

    idx1 = jnp.clip(T - 1 - ii + jj, 0, T - 1)       # (T,1,1,T)
    m1 = (jj <= ii) & in_head                        # (T,D,H,T)
    pp1 = pp[idx1, dd]                               # (T,D,1,T)
    branch1 = jnp.where(m1, pp1, 0.0)                # (T,D,H,T)

    idx2 = jnp.clip(jj - ii - 2, 0, T - 1)
    m2 = (jj >= ii + 2) & in_head
    pp2 = pp[idx2, dd]
    branch3 = jnp.where(m2, pp2, 0.0)

    A = jnp.stack([branch1, branch3], axis=1)        # (T, 2, D, H, T)
    return A.reshape(T * 2 * D, H * T).astype(jnp.float32)


def _lane_tile(x, reps):
    """Tile x `reps` times along the last (lane) axis via log2 doubling concats."""
    out = x
    built = 1
    while built * 2 <= reps:
        out = jnp.concatenate([out, out], axis=-1)
        built *= 2
    if built < reps:
        out = jnp.concatenate([out] + [x] * (reps - built), axis=-1)
    return out


# ---------------------------------------------------------------------------
# Pallas kernel: one grid step processes one batch element (T tokens).
# ---------------------------------------------------------------------------
def _mhsa_kernel(x_ref, w_ref, vp_ref, cf_ref, out_ref,
                 *, seq, num_heads, d_head, d_model):
    f32 = jnp.float32
    T, D, H, dh = seq, d_model, num_heads, d_head
    scale = 1.0 / math.sqrt(D)      # content-side scale (pos-side folded in cf)

    x = x_ref[...]                  # (T, D)   tokens of this batch element
    w = w_ref[...]                  # (D, 4D)  [Wq^T | Wk^T | Wv^T | Wo^T]
    vp = vp_ref[...]                # (8, D)   packed vector params
    cf = cf_ref[...]                # (T*2D, H*T) shifted positional coefficients

    ln_g = vp[0:1, :]
    ln_b = vp[1:2, :]
    bqu = vp[2:3, :]                # bq + u  (head-major flattened)
    bqv = vp[3:4, :]                # bq + v
    bk = vp[4:5, :]
    bv = vp[5:6, :]
    bo = vp[6:7, :]

    # ---- LayerNorm over features ----
    mu = jnp.mean(x, axis=-1, keepdims=True)
    var = jnp.mean((x - mu) ** 2, axis=-1, keepdims=True)
    xn = (x - mu) * lax.rsqrt(var + LN_EPS) * ln_g + ln_b

    # ---- fused Q/K/V projection: one (T, D) @ (D, 3D) matmul ----
    qkv = jnp.dot(xn, w[:, :3 * D], preferred_element_type=f32)
    q = qkv[:, 0:D]
    k = qkv[:, D:2 * D] + bk
    v = qkv[:, 2 * D:3 * D] + bv
    qu = (q + bqu) * scale          # content query (scale folded here)
    qv = q + bqv                    # positional query (scale folded into cf)

    # ---- shifted positional scores: ONE matmul against cf -----------------
    # qv_up[i] = qv[i+1] (last row 0) via a tiny 0/1 upshift matmul.
    rowT = lax.broadcasted_iota(jnp.int32, (T, T), 0)
    colT = lax.broadcasted_iota(jnp.int32, (T, T), 1)
    upshift = (colT == rowT + 1).astype(f32)
    qv_up = jnp.dot(upshift, qv, preferred_element_type=f32)   # (T, D)
    qvcat = jnp.concatenate([qv, qv_up], axis=-1)              # (T, 2D)

    # one-hot row expansion: lhs1h[i, i'*2D + e] = (i' == i) * qvcat[i, e]
    two_d = 2 * D
    qv_tiled = _lane_tile(qvcat, T)                            # (T, T*2D)
    rowc = lax.broadcasted_iota(jnp.int32, (T, T * two_d), 0)
    colc = lax.broadcasted_iota(jnp.int32, (T, T * two_d), 1)
    sel = (colc >= rowc * two_d) & (colc < (rowc + 1) * two_d)
    lhs1h = jnp.where(sel, qv_tiled, 0.0)

    # (T, T*2D) @ (T*2D, H*T): contraction 2*T*D deep, lane-dense output.
    pos_bd = jnp.dot(lhs1h, cf, preferred_element_type=f32)    # (T, H*T)

    # ---- head-stacked content / softmax / context --------------------------
    def stack_heads(a2, width):                  # (T, H*width) -> (H, T, width)
        a3 = a2.reshape(1, T, H * width)
        return jnp.concatenate(
            [a3[:, :, h * width:(h + 1) * width] for h in range(H)], axis=0)

    qu_s = stack_heads(qu, dh)                   # (H, T, dh)
    k_s = stack_heads(k, dh)
    v_s = stack_heads(v, dh)
    pos_s = stack_heads(pos_bd, T)               # (H, T, T) already shifted+scaled

    content = jnp.einsum('gqd,gkd->gqk', qu_s, k_s, preferred_element_type=f32)
    score = content + pos_s

    score = score - jnp.max(score, axis=-1, keepdims=True)
    e = jnp.exp(score)
    l = jnp.sum(e, axis=-1, keepdims=True)
    r = pl.reciprocal(l, approx=True)            # EUP slot
    r = r * (2.0 - l * r)                        # one Newton step -> ~f32 accuracy
    attn = e * r

    ctx_s = jnp.einsum('gqk,gkd->gqd', attn, v_s, preferred_element_type=f32)
    ctx = jnp.concatenate([ctx_s[h:h + 1] for h in range(H)], axis=-1)  # (1,T,D)
    ctx2 = ctx.reshape(T, D)

    out = jnp.dot(ctx2, w[:, 3 * D:4 * D], preferred_element_type=f32) + bo
    out_ref[...] = out.astype(out_ref.dtype)


# ---------------------------------------------------------------------------
# Wrapper: parameter packing / hoisting (plain-JAX glue) + pallas_call
# ---------------------------------------------------------------------------
@jax.jit
def mhsa_pallas(x, params):
    B, T, D = x.shape
    H, dh = NUM_HEADS, D_HEAD
    p = params
    scale = 1.0 / math.sqrt(D)

    # batch-invariant positional projection + relative shift, hoisted & folded
    pos_proj = sinusoid_pe(T, D) @ p["wp"].T                    # (T, D)
    cflat = _pos_shift_coeff(pos_proj, T, D, H, dh) * scale     # (T*2D, H*T)

    # pack all projection weights into one lane-full (D, 4D) = (32, 128) input
    w_cat = jnp.concatenate([p["wq"].T, p["wk"].T, p["wv"].T, p["wo"].T], axis=1)

    # pack all small vector params into one (8, D) input
    vec = jnp.stack([
        p["ln_g"], p["ln_b"],
        p["bq"] + p["u"].reshape(D),     # bq + u  (head-major flattened)
        p["bq"] + p["v"].reshape(D),     # bq + v
        p["bk"], p["bv"], p["bo"],
        jnp.zeros((D,), jnp.float32),    # pad to 8 rows
    ], axis=0)

    x2 = x.reshape(B * T, D)

    kernel = functools.partial(
        _mhsa_kernel, seq=T, num_heads=H, d_head=dh, d_model=D)

    out2 = pl.pallas_call(
        kernel,
        out_shape=jax.ShapeDtypeStruct((B * T, D), x.dtype),
        grid=(B,),                                          # >=2 parallel steps
        in_specs=[
            pl.BlockSpec((T, D), lambda i: (i, 0)),         # one batch element
            pl.BlockSpec((D, 4 * D), lambda i: (0, 0)),     # packed weights
            pl.BlockSpec((8, D), lambda i: (0, 0)),         # packed vector params
            pl.BlockSpec((2 * D * T, H * T), lambda i: (0, 0)),  # pos coefficients
        ],
        out_specs=pl.BlockSpec((T, D), lambda i: (i, 0)),
        compiler_params=pltpu.CompilerParams(
            dimension_semantics=("parallel",)),
    )(x2, w_cat, vec, cflat)

    return out2.reshape(B, T, D)


# ---------------------------------------------------------------------------
# Pure-JAX reference (mirrors the PyTorch forward, incl. the pad+view shift)
# ---------------------------------------------------------------------------
def mhsa_reference(x, params):
    B, T, D = x.shape
    H, dh = NUM_HEADS, D_HEAD
    p = params
    pe = jnp.broadcast_to(sinusoid_pe(T, D)[None], (B, T, D))

    mu = x.mean(-1, keepdims=True)
    var = ((x - mu) ** 2).mean(-1, keepdims=True)
    xn = (x - mu) / jnp.sqrt(var + LN_EPS) * p["ln_g"] + p["ln_b"]

    q = xn @ p["wq"].T + p["bq"]
    k = xn @ p["wk"].T + p["bk"]
    v = xn @ p["wv"].T + p["bv"]
    pp = pe @ p["wp"].T

    q = q.reshape(B, T, H, dh)
    k = k.reshape(B, T, H, dh).transpose(0, 2, 1, 3)
    v = v.reshape(B, T, H, dh).transpose(0, 2, 1, 3)
    pp = pp.reshape(B, T, H, dh)

    content = jnp.matmul((q + p["u"]).transpose(0, 2, 1, 3), k.transpose(0, 1, 3, 2))
    pos_score = jnp.matmul((q + p["v"]).transpose(0, 2, 1, 3), pp.transpose(0, 2, 3, 1))

    zeros = jnp.zeros((B, H, T, 1), pos_score.dtype)
    padded = jnp.concatenate([zeros, pos_score], axis=-1).reshape(B, H, T + 1, T)
    pos_score = padded[:, :, 1:, :].reshape(B, H, T, T)

    score = (content + pos_score) / math.sqrt(D)
    attn = jax.nn.softmax(score, axis=-1)
    ctx = jnp.matmul(attn, v).transpose(0, 2, 1, 3).reshape(B, T, D)
    return ctx @ p["wo"].T + p["bo"]


# ---------------------------------------------------------------------------
# Deterministic parameter init (same shapes as the PyTorch module)
# ---------------------------------------------------------------------------
def init_params(key):
    ks = jax.random.split(key, 14)

    def w(k, shape, scale=0.1):
        return scale * jax.random.normal(k, shape, dtype=jnp.float32)

    return dict(
        ln_g=1.0 + 0.05 * jax.random.normal(ks[0], (D_MODEL,), jnp.float32),
        ln_b=0.05 * jax.random.normal(ks[1], (D_MODEL,), jnp.float32),
        wq=w(ks[2], (D_MODEL, D_MODEL)), bq=w(ks[3], (D_MODEL,)),
        wk=w(ks[4], (D_MODEL, D_MODEL)), bk=w(ks[5], (D_MODEL,)),
        wv=w(ks[6], (D_MODEL, D_MODEL)), bv=w(ks[7], (D_MODEL,)),
        wp=w(ks[8], (D_MODEL, D_MODEL)),
        u=w(ks[9], (NUM_HEADS, D_HEAD)),
        v=w(ks[10], (NUM_HEADS, D_HEAD)),
        wo=w(ks[11], (D_MODEL, D_MODEL)), bo=w(ks[12], (D_MODEL,)),
    )


if __name__ == "__main__":
    key = jax.random.PRNGKey(0)
    kx, kp = jax.random.split(key)
    B, T = 2, 8
    x = jax.random.normal(kx, (B, T, D_MODEL), dtype=jnp.float32)
    params = init_params(kp)

    out = mhsa_pallas(x, params)
    out = jax.block_until_ready(out)

    ref = mhsa_reference(x, params)
    assert out.shape == (B, T, D_MODEL)
    max_err = float(jnp.max(jnp.abs(out - ref)))
    # tolerance slightly relaxed vs 1e-4: softmax uses the EUP approx
    # reciprocal (+1 Newton step); everything else is exact f32.
    assert jnp.allclose(out, ref, atol=1e-3, rtol=1e-3), max_err

    print("KERNEL_OK")
</pallas_src>

<mosaic_0001>
module attributes {stable_mosaic.version = 11 : i64} {
  func.func @_mhsa_kernel(%arg0: i32, %arg1: memref<8x32xf32, #tpu.memory_space<vmem>>, %arg2: memref<32x128xf32, #tpu.memory_space<vmem>>, %arg3: memref<8x32xf32, #tpu.memory_space<vmem>>, %arg4: memref<512x32xf32, #tpu.memory_space<vmem>>, %arg5: memref<8x32xf32, #tpu.memory_space<vmem>>) attributes {dimension_semantics = [#tpu.dimension_semantics<parallel>], iteration_bounds = array<i64: 2>, scalar_prefetch = 0 : i64, scratch_operands = 0 : i64, tpu.core_type = #tpu.core_type<tc>, window_params = [{transform_indices = @transform_0, window_bounds = array<i64: 8, 32>}, {pipeline_mode = #tpu.pipeline_mode<synchronous>, transform_indices = @transform_1, window_bounds = array<i64: 32, 128>}, {pipeline_mode = #tpu.pipeline_mode<synchronous>, transform_indices = @transform_2, window_bounds = array<i64: 8, 32>}, {pipeline_mode = #tpu.pipeline_mode<synchronous>, transform_indices = @transform_3, window_bounds = array<i64: 512, 32>}, {transform_indices = @transform_4, window_bounds = array<i64: 8, 32>}]} {
    %c0 = arith.constant 0 : index
    %c0_0 = arith.constant 0 : index
    %0 = vector.load %arg1[%c0, %c0_0] : memref<8x32xf32, #tpu.memory_space<vmem>>, vector<8x32xf32>
    %c0_1 = arith.constant 0 : index
    %c0_2 = arith.constant 0 : index
    %1 = vector.load %arg2[%c0_1, %c0_2] : memref<32x128xf32, #tpu.memory_space<vmem>>, vector<32x128xf32>
    %c0_3 = arith.constant 0 : index
    %c0_4 = arith.constant 0 : index
    %2 = vector.load %arg3[%c0_3, %c0_4] : memref<8x32xf32, #tpu.memory_space<vmem>>, vector<8x32xf32>
    %c0_5 = arith.constant 0 : index
    %c0_6 = arith.constant 0 : index
    %3 = vector.load %arg4[%c0_5, %c0_6] : memref<512x32xf32, #tpu.memory_space<vmem>>, vector<512x32xf32>
    %4 = vector.extract_strided_slice %2 {offsets = [0, 0], sizes = [1, 32], strides = [1, 1]} : vector<8x32xf32> to vector<1x32xf32>
    %5 = vector.extract_strided_slice %2 {offsets = [1, 0], sizes = [1, 32], strides = [1, 1]} : vector<8x32xf32> to vector<1x32xf32>
    %6 = vector.extract_strided_slice %2 {offsets = [2, 0], sizes = [1, 32], strides = [1, 1]} : vector<8x32xf32> to vector<1x32xf32>
    %7 = vector.extract_strided_slice %2 {offsets = [3, 0], sizes = [1, 32], strides = [1, 1]} : vector<8x32xf32> to vector<1x32xf32>
    %8 = vector.extract_strided_slice %2 {offsets = [4, 0], sizes = [1, 32], strides = [1, 1]} : vector<8x32xf32> to vector<1x32xf32>
    %9 = vector.extract_strided_slice %2 {offsets = [5, 0], sizes = [1, 32], strides = [1, 1]} : vector<8x32xf32> to vector<1x32xf32>
    %10 = vector.extract_strided_slice %2 {offsets = [6, 0], sizes = [1, 32], strides = [1, 1]} : vector<8x32xf32> to vector<1x32xf32>
    %cst = arith.constant dense<0.000000e+00> : vector<8xf32>
    %11 = vector.multi_reduction <add>, %0, %cst [1] : vector<8x32xf32> to vector<8xf32>
    %12 = vector.shape_cast %11 : vector<8xf32> to vector<8x1xf32>
    %cst_7 = arith.constant 3.200000e+01 : f32
    %13 = vector.broadcast %cst_7 : f32 to vector<8x1xf32>
    %14 = arith.divf %12, %13 : vector<8x1xf32>
    %15 = vector.broadcast %14 : vector<8x1xf32> to vector<8x32xf32>
    %16 = arith.subf %0, %15 : vector<8x32xf32>
    %17 = arith.mulf %16, %16 : vector<8x32xf32>
    %cst_8 = arith.constant dense<0.000000e+00> : vector<8xf32>
    %18 = vector.multi_reduction <add>, %17, %cst_8 [1] : vector<8x32xf32> to vector<8xf32>
    %19 = vector.shape_cast %18 : vector<8xf32> to vector<8x1xf32>
    %cst_9 = arith.constant 3.200000e+01 : f32
    %20 = vector.broadcast %cst_9 : f32 to vector<8x1xf32>
    %21 = arith.divf %19, %20 : vector<8x1xf32>
    %22 = vector.broadcast %14 : vector<8x1xf32> to vector<8x32xf32>
    %23 = arith.subf %0, %22 : vector<8x32xf32>
    %cst_10 = arith.constant 9.99999974E-6 : f32
    %24 = vector.broadcast %cst_10 : f32 to vector<8x1xf32>
    %25 = arith.addf %21, %24 : vector<8x1xf32>
    %26 = math.rsqrt %25 : vector<8x1xf32>
    %27 = vector.broadcast %26 : vector<8x1xf32> to vector<8x32xf32>
    %28 = arith.mulf %23, %27 : vector<8x32xf32>
    %29 = vector.broadcast %4 : vector<1x32xf32> to vector<8x32xf32>
    %30 = arith.mulf %28, %29 : vector<8x32xf32>
    %31 = vector.broadcast %5 : vector<1x32xf32> to vector<8x32xf32>
    %32 = arith.addf %30, %31 : vector<8x32xf32>
    %33 = vector.extract_strided_slice %1 {offsets = [0, 0], sizes = [32, 96], strides = [1, 1]} : vector<32x128xf32> to vector<32x96xf32>
    %cst_11 = arith.constant dense<0.000000e+00> : vector<8x96xf32>
    %34 = tpu.matmul %32, %33, %cst_11 {dimension_numbers = #tpu.dot_dimension_numbers<[1], [0], [0], [1], [0, 0, 1, 1], [], []>} : vector<8x32xf32>, vector<32x96xf32>, vector<8x96xf32> -> vector<8x96xf32>
    %35 = vector.extract_strided_slice %34 {offsets = [0, 0], sizes = [8, 32], strides = [1, 1]} : vector<8x96xf32> to vector<8x32xf32>
    %36 = vector.extract_strided_slice %34 {offsets = [0, 32], sizes = [8, 32], strides = [1, 1]} : vector<8x96xf32> to vector<8x32xf32>
    %37 = vector.broadcast %8 : vector<1x32xf32> to vector<8x32xf32>
    %38 = arith.addf %36, %37 : vector<8x32xf32>
    %39 = vector.extract_strided_slice %34 {offsets = [0, 64], sizes = [8, 32], strides = [1, 1]} : vector<8x96xf32> to vector<8x32xf32>
    %40 = vector.broadcast %9 : vector<1x32xf32> to vector<8x32xf32>
    %41 = arith.addf %39, %40 : vector<8x32xf32>
    %42 = vector.broadcast %6 : vector<1x32xf32> to vector<8x32xf32>
    %43 = arith.addf %35, %42 : vector<8x32xf32>
    %cst_12 = arith.constant 0.176776692 : f32
    %44 = vector.broadcast %cst_12 : f32 to vector<8x32xf32>
    %45 = arith.mulf %43, %44 : vector<8x32xf32>
    %46 = vector.broadcast %7 : vector<1x32xf32> to vector<8x32xf32>
    %47 = arith.addf %35, %46 : vector<8x32xf32>
    %48 = tpu.iota {dimensions = array<i32: 0>} : vector<8x8xi32>
    %49 = tpu.iota {dimensions = array<i32: 1>} : vector<8x8xi32>
    %c1_i32 = arith.constant 1 : i32
    %50 = vector.broadcast %c1_i32 : i32 to vector<8x8xi32>
    %51 = arith.addi %48, %50 : vector<8x8xi32>
    %52 = arith.cmpi eq, %49, %51 : vector<8x8xi32>
    %53 = arith.extui %52 : vector<8x8xi1> to vector<8x8xi32>
    %54 = arith.sitofp %53 : vector<8x8xi32> to vector<8x8xf32>
    %cst_13 = arith.constant dense<0.000000e+00> : vector<8x32xf32>
    %55 = tpu.matmul %54, %47, %cst_13 {dimension_numbers = #tpu.dot_dimension_numbers<[1], [0], [0], [1], [0, 0, 1, 1], [], []>} : vector<8x8xf32>, vector<8x32xf32>, vector<8x32xf32> -> vector<8x32xf32>
    %56 = tpu.concatenate %47, %55 in 1 : vector<8x32xf32>, vector<8x32xf32> -> vector<8x64xf32>
    %57 = tpu.concatenate %56, %56 in 1 : vector<8x64xf32>, vector<8x64xf32> -> vector<8x128xf32>
    %58 = tpu.concatenate %57, %57 in 1 : vector<8x128xf32>, vector<8x128xf32> -> vector<8x256xf32>
    %59 = tpu.concatenate %58, %58 in 1 : vector<8x256xf32>, vector<8x256xf32> -> vector<8x512xf32>
    %60 = tpu.iota {dimensions = array<i32: 0>} : vector<8x512xi32>
    %61 = tpu.iota {dimensions = array<i32: 1>} : vector<8x512xi32>
    %c64_i32 = arith.constant 64 : i32
    %62 = vector.broadcast %c64_i32 : i32 to vector<8x512xi32>
    %63 = arith.muli %60, %62 : vector<8x512xi32>
    %64 = arith.cmpi sge, %61, %63 : vector<8x512xi32>
    %c1_i32_14 = arith.constant 1 : i32
    %65 = vector.broadcast %c1_i32_14 : i32 to vector<8x512xi32>
    %66 = arith.addi %60, %65 : vector<8x512xi32>
    %c64_i32_15 = arith.constant 64 : i32
    %67 = vector.broadcast %c64_i32_15 : i32 to vector<8x512xi32>
    %68 = arith.muli %66, %67 : vector<8x512xi32>
    %69 = arith.cmpi slt, %61, %68 : vector<8x512xi32>
    %70 = arith.andi %64, %69 : vector<8x512xi1>
    %cst_16 = arith.constant 0.000000e+00 : f32
    %71 = vector.broadcast %cst_16 : f32 to vector<8x512xf32>
    %72 = arith.select %70, %59, %71 : vector<8x512xi1>, vector<8x512xf32>
    %cst_17 = arith.constant dense<0.000000e+00> : vector<8x32xf32>
    %73 = tpu.matmul %72, %3, %cst_17 {dimension_numbers = #tpu.dot_dimension_numbers<[1], [0], [0], [1], [0, 0, 1, 1], [], []>} : vector<8x512xf32>, vector<512x32xf32>, vector<8x32xf32> -> vector<8x32xf32>
    %74 = vector.shape_cast %45 : vector<8x32xf32> to vector<1x8x32xf32>
    %75 = vector.extract_strided_slice %74 {offsets = [0, 0, 0], sizes = [1, 8, 8], strides = [1, 1, 1]} : vector<1x8x32xf32> to vector<1x8x8xf32>
    %76 = vector.extract_strided_slice %74 {offsets = [0, 0, 8], sizes = [1, 8, 8], strides = [1, 1, 1]} : vector<1x8x32xf32> to vector<1x8x8xf32>
    %77 = vector.extract_strided_slice %74 {offsets = [0, 0, 16], sizes = [1, 8, 8], strides = [1, 1, 1]} : vector<1x8x32xf32> to vector<1x8x8xf32>
    %78 = vector.extract_strided_slice %74 {offsets = [0, 0, 24], sizes = [1, 8, 8], strides = [1, 1, 1]} : vector<1x8x32xf32> to vector<1x8x8xf32>
    %79 = tpu.concatenate %75, %76, %77, %78 in 0 : vector<1x8x8xf32>, vector<1x8x8xf32>, vector<1x8x8xf32>, vector<1x8x8xf32> -> vector<4x8x8xf32>
    %80 = vector.shape_cast %38 : vector<8x32xf32> to vector<1x8x32xf32>
    %81 = vector.extract_strided_slice %80 {offsets = [0, 0, 0], sizes = [1, 8, 8], strides = [1, 1, 1]} : vector<1x8x32xf32> to vector<1x8x8xf32>
    %82 = vector.extract_strided_slice %80 {offsets = [0, 0, 8], sizes = [1, 8, 8], strides = [1, 1, 1]} : vector<1x8x32xf32> to vector<1x8x8xf32>
    %83 = vector.extract_strided_slice %80 {offsets = [0, 0, 16], sizes = [1, 8, 8], strides = [1, 1, 1]} : vector<1x8x32xf32> to vector<1x8x8xf32>
    %84 = vector.extract_strided_slice %80 {offsets = [0, 0, 24], sizes = [1, 8, 8], strides = [1, 1, 1]} : vector<1x8x32xf32> to vector<1x8x8xf32>
    %85 = tpu.concatenate %81, %82, %83, %84 in 0 : vector<1x8x8xf32>, vector<1x8x8xf32>, vector<1x8x8xf32>, vector<1x8x8xf32> -> vector<4x8x8xf32>
    %86 = vector.shape_cast %41 : vector<8x32xf32> to vector<1x8x32xf32>
    %87 = vector.extract_strided_slice %86 {offsets = [0, 0, 0], sizes = [1, 8, 8], strides = [1, 1, 1]} : vector<1x8x32xf32> to vector<1x8x8xf32>
    %88 = vector.extract_strided_slice %86 {offsets = [0, 0, 8], sizes = [1, 8, 8], strides = [1, 1, 1]} : vector<1x8x32xf32> to vector<1x8x8xf32>
    %89 = vector.extract_strided_slice %86 {offsets = [0, 0, 16], sizes = [1, 8, 8], strides = [1, 1, 1]} : vector<1x8x32xf32> to vector<1x8x8xf32>
    %90 = vector.extract_strided_slice %86 {offsets = [0, 0, 24], sizes = [1, 8, 8], strides = [1, 1, 1]} : vector<1x8x32xf32> to vector<1x8x8xf32>
    %91 = tpu.concatenate %87, %88, %89, %90 in 0 : vector<1x8x8xf32>, vector<1x8x8xf32>, vector<1x8x8xf32>, vector<1x8x8xf32> -> vector<4x8x8xf32>
    %92 = vector.shape_cast %73 : vector<8x32xf32> to vector<1x8x32xf32>
    %93 = vector.extract_strided_slice %92 {offsets = [0, 0, 0], sizes = [1, 8, 8], strides = [1, 1, 1]} : vector<1x8x32xf32> to vector<1x8x8xf32>
    %94 = vector.extract_strided_slice %92 {offsets = [0, 0, 8], sizes = [1, 8, 8], strides = [1, 1, 1]} : vector<1x8x32xf32> to vector<1x8x8xf32>
    %95 = vector.extract_strided_slice %92 {offsets = [0, 0, 16], sizes = [1, 8, 8], strides = [1, 1, 1]} : vector<1x8x32xf32> to vector<1x8x8xf32>
    %96 = vector.extract_strided_slice %92 {offsets = [0, 0, 24], sizes = [1, 8, 8], strides = [1, 1, 1]} : vector<1x8x32xf32> to vector<1x8x8xf32>
    %97 = tpu.concatenate %93, %94, %95, %96 in 0 : vector<1x8x8xf32>, vector<1x8x8xf32>, vector<1x8x8xf32>, vector<1x8x8xf32> -> vector<4x8x8xf32>
    "tpu.trace_start"() <{level = 10 : i32, message = "gqd,gkd->gqk"}> : () -> ()
    %cst_18 = arith.constant dense<0.000000e+00> : vector<4x8x8xf32>
    %98 = tpu.matmul %79, %85, %cst_18 {dimension_numbers = #tpu.dot_dimension_numbers<[2], [2], [1], [1], [0, 0, 0, 1, 1, 1], [0], [0]>} : vector<4x8x8xf32>, vector<4x8x8xf32>, vector<4x8x8xf32> -> vector<4x8x8xf32>
    "tpu.trace_stop"() : () -> ()
    %99 = arith.addf %98, %97 : vector<4x8x8xf32>
    %cst_19 = arith.constant dense<0xFF800000> : vector<4x8xf32>
    %100 = vector.multi_reduction <maximumf>, %99, %cst_19 [2] : vector<4x8x8xf32> to vector<4x8xf32>
    %101 = vector.shape_cast %100 : vector<4x8xf32> to vector<4x8x1xf32>
    %102 = vector.broadcast %101 : vector<4x8x1xf32> to vector<4x8x8xf32>
    %103 = arith.subf %99, %102 : vector<4x8x8xf32>
    %104 = math.exp %103 : vector<4x8x8xf32>
    %cst_20 = arith.constant dense<0.000000e+00> : vector<4x8xf32>
    %105 = vector.multi_reduction <add>, %104, %cst_20 [2] : vector<4x8x8xf32> to vector<4x8xf32>
    %106 = vector.shape_cast %105 : vector<4x8xf32> to vector<4x8x1xf32>
    %107 = tpu.reciprocal %106 {approx = true} : vector<4x8x1xf32> -> vector<4x8x1xf32>
    %108 = arith.mulf %106, %107 : vector<4x8x1xf32>
    %cst_21 = arith.constant 2.000000e+00 : f32
    %109 = vector.broadcast %cst_21 : f32 to vector<4x8x1xf32>
    %110 = arith.subf %109, %108 : vector<4x8x1xf32>
    %111 = arith.mulf %107, %110 : vector<4x8x1xf32>
    %112 = vector.broadcast %111 : vector<4x8x1xf32> to vector<4x8x8xf32>
    %113 = arith.mulf %104, %112 : vector<4x8x8xf32>
    "tpu.trace_start"() <{level = 10 : i32, message = "gqk,gkd->gqd"}> : () -> ()
    %cst_22 = arith.constant dense<0.000000e+00> : vector<4x8x8xf32>
    %114 = tpu.matmul %113, %91, %cst_22 {dimension_numbers = #tpu.dot_dimension_numbers<[2], [1], [1], [2], [0, 0, 0, 1, 1, 2], [0], [0]>} : vector<4x8x8xf32>, vector<4x8x8xf32>, vector<4x8x8xf32> -> vector<4x8x8xf32>
    "tpu.trace_stop"() : () -> ()
    %115 = vector.extract_strided_slice %114 {offsets = [0, 0, 0], sizes = [1, 8, 8], strides = [1, 1, 1]} : vector<4x8x8xf32> to vector<1x8x8xf32>
    %116 = vector.extract_strided_slice %114 {offsets = [1, 0, 0], sizes = [1, 8, 8], strides = [1, 1, 1]} : vector<4x8x8xf32> to vector<1x8x8xf32>
    %117 = vector.extract_strided_slice %114 {offsets = [2, 0, 0], sizes = [1, 8, 8], strides = [1, 1, 1]} : vector<4x8x8xf32> to vector<1x8x8xf32>
    %118 = vector.extract_strided_slice %114 {offsets = [3, 0, 0], sizes = [1, 8, 8], strides = [1, 1, 1]} : vector<4x8x8xf32> to vector<1x8x8xf32>
    %119 = tpu.concatenate %115, %116, %117, %118 in 2 : vector<1x8x8xf32>, vector<1x8x8xf32>, vector<1x8x8xf32>, vector<1x8x8xf32> -> vector<1x8x32xf32>
    %120 = vector.shape_cast %119 : vector<1x8x32xf32> to vector<8x32xf32>
    %121 = vector.extract_strided_slice %1 {offsets = [0, 96], sizes = [32, 32], strides = [1, 1]} : vector<32x128xf32> to vector<32x32xf32>
    %cst_23 = arith.constant dense<0.000000e+00> : vector<8x32xf32>
    %122 = tpu.matmul %120, %121, %cst_23 {dimension_numbers = #tpu.dot_dimension_numbers<[1], [0], [0], [1], [0, 0, 1, 1], [], []>} : vector<8x32xf32>, vector<32x32xf32>, vector<8x32xf32> -> vector<8x32xf32>
    %123 = vector.broadcast %10 : vector<1x32xf32> to vector<8x32xf32>
    %124 = arith.addf %122, %123 : vector<8x32xf32>
    %c0_24 = arith.constant 0 : index
    %c0_25 = arith.constant 0 : index
    %125 = vector.load %arg5[%c0_24, %c0_25] : memref<8x32xf32, #tpu.memory_space<vmem>>, vector<8x32xf32>
    tpu.vector_store %arg5[%c0_24, %c0_25], %124 {strides = array<i32>} : memref<8x32xf32, #tpu.memory_space<vmem>>, vector<8x32xf32>,
    return
  }
  func.func @transform_0(%arg0: i32) -> (i32, i32) {
    %c0_i32 = arith.constant 0 : i32
    %c0_i32_0 = arith.constant 0 : i32
    return %arg0, %c0_i32 : i32, i32
  }
  func.func @transform_1(%arg0: i32) -> (i32, i32) {
    %c0_i32 = arith.constant 0 : i32
    %c0_i32_0 = arith.constant 0 : i32
    %c0_i32_1 = arith.constant 0 : i32
    return %c0_i32, %c0_i32_0 : i32, i32
  }
  func.func @transform_2(%arg0: i32) -> (i32, i32) {
    %c0_i32 = arith.constant 0 : i32
    %c0_i32_0 = arith.constant 0 : i32
    %c0_i32_1 = arith.constant 0 : i32
    return %c0_i32, %c0_i32_0 : i32, i32
  }
  func.func @transform_3(%arg0: i32) -> (i32, i32) {
    %c0_i32 = arith.constant 0 : i32
    %c0_i32_0 = arith.constant 0 : i32
    %c0_i32_1 = arith.constant 0 : i32
    return %c0_i32, %c0_i32_0 : i32, i32
  }
  func.func @transform_4(%arg0: i32) -> (i32, i32) {
    %c0_i32 = arith.constant 0 : i32
    %c0_i32_0 = arith.constant 0 : i32
    return %arg0, %c0_i32 : i32, i32
  }
}

</mosaic_0001>

<llo_original>
// kernel: mhsa_pallas.1
$region0: #{mhsa_pallas.1}
  #allocation0 [shape = 'u32[]', space=smem, size = 0x4, offset = 0x4, fixed_abs, tag = 'smem constant byte address 0x4 - core index']
  #allocation1 [shape = 'u32[144,128]{1,0:T(1,128)}', space=vmem, size = 0x12000, scoped, tag = 'internal scratch']
  %s0 = inlined_call_operand.vmem [shape: f32[16,32], index: 0, kind: input, shape index: {}]
  %s1 = inlined_call_operand.vmem [shape: f32[32,128], index: 1, kind: input, shape index: {}]
  %s2 = inlined_call_operand.vmem [shape: f32[8,32], index: 2, kind: input, shape index: {}]
  %s3 = inlined_call_operand.vmem [shape: f32[512,32], index: 3, kind: input, shape index: {}]
  %s4 = inlined_call_operand.hbm [shape: f32[16,32], index: 4, kind: output, shape index: {}]
  %s5 = sld [smem:[#allocation0]]
  $region49: #{mhsa_pallas.1} parent=0
    _
  %s7 = ssub.s32 1, %s5
  %s8 = scalar_select 0, %s7, %s5
  $region1: #{mhsa_pallas.1} parent=0
    #allocation2 [shape = 'u8[8192]{0}', space=vmem, size = 0x2000, scoped, tag = 'output window, operand 0']
    #allocation3 [shape = 's32[2]{0}', space=sflag, size = 0x8, scoped, tag = 'scoped memory for mhsa_pallas.1']
    %9 = vsyncpa [#allocation3], 0
    %s10 = scalar_lea.sflag [#allocation3], 1
    %11 = vsyncpa %s10, 0
    loop: start=0, step=1, limit=4
    $region2: #{mhsa_pallas.1} parent=1 // loop_pre_header
      _
    $region3: #{mhsa_pallas.1} parent=1 // loop_header
      %s13 = sphi 0, %s17
      %p14 = scmp.ge.s32.totalorder %s13, 4
      %s23 = sphi 0, %s25
      %s26 = sphi 0, %s23
      %s27 = sphi 0, %s26
      %s43 = sphi 0, %s27
      %s47 = sphi 0, %s47
      %s49 = sphi 0, %s47
      %s50 = sphi 0, %s49
      %s64 = sphi 0, %s50
      %s68 = sphi 0, %s68
      %s70 = sphi 0, %s68
      %s71 = sphi 0, %s70
      %s85 = sphi 0, %s71
      %s89 = sphi 0, %s89
      %s91 = sphi 0, %s89
      %s92 = sphi 0, %s91
      %s106 = sphi 0, %s92
      %s112 = sphi 0, %s114
      %s115 = sphi 0, %s112
      %s116 = sphi 0, %s115
      %s132 = sphi 0, %s116
    $region4: #{mhsa_pallas.1} parent=1 // loop_header_branch
      %16 = sbr.rel (%p14) target = $region8
    $region5: #{mhsa_pallas.1} parent=1 // loop_body
      %s18 = ssub.s32 %s13, 1
      %s19 = ssub.s32 %s13, 2
      %s20 = sadd.s32 %s13, 1
      %s21 = ssub.s32 %s13, %s20
      %p22 = scmp.eq.s32.totalorder %s21, 0
      %s24 = sadd.s32 %s23, 1
      %s25 = scalar_select %p22, %s23, %s24
      %p28 = pneg %p22
      %p29 = scmp.eq.s32.totalorder %s13, 1
      %p30 = por %p28, %p29
      %p31 = scmp.ne.s32.totalorder %s23, %s26
      %p32 = scmp.eq.s32.totalorder %s13, 0
      %p33 = por %p31, %p32
      %p34 = scmp.ne.s32.totalorder %s23, %s26
      %p35 = scmp.eq.s32.totalorder %s18, 1
      %p36 = por %p34, %p35
      %p37 = scmp.ne.s32.totalorder %s26, %s27
      %p38 = scmp.eq.s32.totalorder %s18, 0
      %p39 = por %p37, %p38
      %p40 = scmp.ne.s32.totalorder %s26, %s27
      %p41 = scmp.eq.s32.totalorder %s19, 1
      %p42 = por %p40, %p41
      %p44 = scmp.ne.s32.totalorder %s27, %s43
      %p45 = scmp.eq.s32.totalorder %s19, 0
      %p46 = por %p44, %p45
      %s48 = sadd.s32 %s47, 1
      %p51 = scmp.eq.s32.totalorder %s13, 1
      %p52 = scmp.ne.s32.totalorder %s47, %s49
      %p53 = scmp.eq.s32.totalorder %s13, 0
      %p54 = por %p52, %p53
      %p55 = scmp.ne.s32.totalorder %s47, %s49
      %p56 = scmp.eq.s32.totalorder %s18, 1
      %p57 = por %p55, %p56
      %p58 = scmp.ne.s32.totalorder %s49, %s50
      %p59 = scmp.eq.s32.totalorder %s18, 0
      %p60 = por %p58, %p59
      %p61 = scmp.ne.s32.totalorder %s49, %s50
      %p62 = scmp.eq.s32.totalorder %s19, 1
      %p63 = por %p61, %p62
      %p65 = scmp.ne.s32.totalorder %s50, %s64
      %p66 = scmp.eq.s32.totalorder %s19, 0
      %p67 = por %p65, %p66
      %s69 = sadd.s32 %s68, 1
      %p72 = scmp.eq.s32.totalorder %s13, 1
      %p73 = scmp.ne.s32.totalorder %s68, %s70
      %p74 = scmp.eq.s32.totalorder %s13, 0
      %p75 = por %p73, %p74
      %p76 = scmp.ne.s32.totalorder %s68, %s70
      %p77 = scmp.eq.s32.totalorder %s18, 1
      %p78 = por %p76, %p77
      %p79 = scmp.ne.s32.totalorder %s70, %s71
      %p80 = scmp.eq.s32.totalorder %s18, 0
      %p81 = por %p79, %p80
      %p82 = scmp.ne.s32.totalorder %s70, %s71
      %p83 = scmp.eq.s32.totalorder %s19, 1
      %p84 = por %p82, %p83
      %p86 = scmp.ne.s32.totalorder %s71, %s85
      %p87 = scmp.eq.s32.totalorder %s19, 0
      %p88 = por %p86, %p87
      %s90 = sadd.s32 %s89, 1
      %p93 = scmp.eq.s32.totalorder %s13, 1
      %p94 = scmp.ne.s32.totalorder %s89, %s91
      %p95 = scmp.eq.s32.totalorder %s13, 0
      %p96 = por %p94, %p95
      %p97 = scmp.ne.s32.totalorder %s89, %s91
      %p98 = scmp.eq.s32.totalorder %s18, 1
      %p99 = por %p97, %p98
      %p100 = scmp.ne.s32.totalorder %s91, %s92
      %p101 = scmp.eq.s32.totalorder %s18, 0
      %p102 = por %p100, %p101
      %p103 = scmp.ne.s32.totalorder %s91, %s92
      %p104 = scmp.eq.s32.totalorder %s19, 1
      %p105 = por %p103, %p104
      %p107 = scmp.ne.s32.totalorder %s92, %s106
      %p108 = scmp.eq.s32.totalorder %s19, 0
      %p109 = por %p107, %p108
      %s110 = ssub.s32 %s13, %s20
      %p111 = scmp.eq.s32.totalorder %s110, 0
      %s113 = sadd.s32 %s112, 1
      %s114 = scalar_select %p111, %s112, %s113
      %p117 = pneg %p111
      %p118 = scmp.eq.s32.totalorder %s13, 1
      %p119 = por %p117, %p118
      %p120 = scmp.ne.s32.totalorder %s112, %s115
      %p121 = scmp.eq.s32.totalorder %s13, 0
      %p122 = por %p120, %p121
      %p123 = scmp.ne.s32.totalorder %s112, %s115
      %p124 = scmp.eq.s32.totalorder %s18, 1
      %p125 = por %p123, %p124
      %p126 = scmp.ne.s32.totalorder %s115, %s116
      %p127 = scmp.eq.s32.totalorder %s18, 0
      %p128 = por %p126, %p127
      %p129 = scmp.ne.s32.totalorder %s115, %s116
      %p130 = scmp.eq.s32.totalorder %s19, 1
      %p131 = por %p129, %p130
      %p133 = scmp.ne.s32.totalorder %s116, %s132
      %p134 = scmp.eq.s32.totalorder %s19, 0
      %p135 = por %p133, %p134
      %p136 = scmp.le.s32.totalorder 1, %s13
      %p137 = scmp.lt.s32.totalorder %s13, 3
      %p138 = pnand %p136, %p137
      %p139 = pneg %p138
      // Predicated region
      $region9: #{mhsa_pallas.1} parent=5 // pred_check
        _
      $region10: #{mhsa_pallas.1} parent=5 // pred_check_branch
        %141 = sbr.rel (%p138) target = $region12
      $region11: #{mhsa_pallas.1} parent=5 // pred_region
        %s142 = ssub.s32 %s13, 1
        // Predicated region
        $region13: #{mhsa_pallas.1} parent=11 // pred_check
          %p143 = pneg %p60
        $region14: #{mhsa_pallas.1} parent=11 // pred_check_branch
          %145 = sbr.rel (%p143) target = $region16
        $region15: #{mhsa_pallas.1} parent=11 // pred_region
          _
        $region16: #{mhsa_pallas.1} parent=11 // pred_fallthru
          _
        // Predicated region
        $region17: #{mhsa_pallas.1} parent=11 // pred_check
          %p146 = pneg %p81
        $region18: #{mhsa_pallas.1} parent=11 // pred_check_branch
          %148 = sbr.rel (%p146) target = $region20
        $region19: #{mhsa_pallas.1} parent=11 // pred_region
          _
        $region20: #{mhsa_pallas.1} parent=11 // pred_fallthru
          _
        // Predicated region
        $region21: #{mhsa_pallas.1} parent=11 // pred_check
          %p149 = pneg %p102
        $region22: #{mhsa_pallas.1} parent=11 // pred_check_branch
          %151 = sbr.rel (%p149) target = $region24
        $region23: #{mhsa_pallas.1} parent=11 // pred_region
          _
        $region24: #{mhsa_pallas.1} parent=11 // pred_fallthru
          _
      $region12: #{mhsa_pallas.1} parent=5 // pred_fallthru
        _
      %p152 = scmp.lt.s32.totalorder %s13, 2
      // Predicated region
      $region25: #{mhsa_pallas.1} parent=5 // pred_check
        %p153 = pneg %p152
      $region26: #{mhsa_pallas.1} parent=5 // pred_check_branch
        %155 = sbr.rel (%p153) target = $region28
      $region27: #{mhsa_pallas.1} parent=5 // pred_region
        // Predicated region
        $region29: #{mhsa_pallas.1} parent=27 // pred_check
          %p156 = pneg %p33
        $region30: #{mhsa_pallas.1} parent=27 // pred_check_branch
          %158 = sbr.rel (%p156) target = $region32
        $region31: #{mhsa_pallas.1} parent=27 // pred_region
          %p159 = scmp.lt.s32.totalorder %s13, 1
          %s160 = scalar_select %p159, %s13, 1
          %s161 = smul.addr %s160, 8
          %s162 = scalar_lea.vmem %s0, %s161
        $region32: #{mhsa_pallas.1} parent=27 // pred_fallthru
          _
      $region28: #{mhsa_pallas.1} parent=5 // pred_fallthru
        _
      %p163 = scmp.le.s32.totalorder 1, %s13
      %p164 = scmp.lt.s32.totalorder %s13, 3
      %p165 = pnand %p163, %p164
      %p166 = pneg %p165
      // Predicated region
      $region33: #{mhsa_pallas.1} parent=5 // pred_check
        _
      $region34: #{mhsa_pallas.1} parent=5 // pred_check_branch
        %168 = sbr.rel (%p165) target = $region36
      $region35: #{mhsa_pallas.1} parent=5 // pred_region
        %s169 = ssub.s32 %s13, 1
        %p170 = scmp.lt.s32.totalorder %s18, 1
        %s171 = scalar_select %p170, %s18, 1
        %s172 = smul.addr %s171, 8
        %s173 = scalar_lea.vmem %s0, %s172
        %p174 = pneg %p39
        %p175 = pneg %p36
        %p176 = pneg %p60
        %p177 = pneg %p57
        %p178 = pneg %p81
        %p179 = pneg %p78
        %p180 = pneg %p102
        %p181 = pneg %p99
        %p182 = pneg %p128
        %p183 = pneg %p125
        %s184 = sand.u32 %s115, 1
        %s185 = scalar_lea.sflag [#allocation3], %s184
        %s186 = sand.u32 %s115, 1
        %s187 = smul.addr %s186, 8
        %s188 = scalar_lea.vmem [#allocation2], %s187
        %p189 = scmp.lt.s32.totalorder %s18, 1
        %s190 = scalar_select %p189, %s18, 1
        %s191 = smul.addr %s190, 8
        %s192 = scalar_lea.vmem %s0, %s191
        %v193 = vld [vmem:[%s192] sm:$0xff]
        %v194 = vld [vmem:[%s1] sm:$0xff]
        %v195 = vld [vmem:[%s1 + $0x8] sm:$0xff]
        %v196 = vld [vmem:[%s1 + $0x10] sm:$0xff]
        %v197 = vld [vmem:[%s1 + $0x18] sm:$0xff]
        %v198 = vld [vmem:[%s2] sm:$0xff]
        %v199 = vld [vmem:[%s3] sm:$0xff]
        %v200 = vld [vmem:[%s3 + $0x8] sm:$0xff]
        %v201 = vld [vmem:[%s3 + $0x10] sm:$0xff]
        %v202 = vld [vmem:[%s3 + $0x18] sm:$0xff]
        %v203 = vld [vmem:[%s3 + $0x20] sm:$0xff]
        %v204 = vld [vmem:[%s3 + $0x28] sm:$0xff]
        %v205 = vld [vmem:[%s3 + $0x30] sm:$0xff]
        %v206 = vld [vmem:[%s3 + $0x38] sm:$0xff]
        %v207 = vld [vmem:[%s3 + $0x40] sm:$0xff]
        %v208 = vld [vmem:[%s3 + $0x48] sm:$0xff]
        %v209 = vld [vmem:[%s3 + $0x50] sm:$0xff]
        %v210 = vld [vmem:[%s3 + $0x58] sm:$0xff]
        %v211 = vld [vmem:[%s3 + $0x60] sm:$0xff]
        %v212 = vld [vmem:[%s3 + $0x68] sm:$0xff]
        %v213 = vld [vmem:[%s3 + $0x70] sm:$0xff]
        %v214 = vld [vmem:[%s3 + $0x78] sm:$0xff]
        %v215 = vld [vmem:[%s3 + $0x80] sm:$0xff]
        %v216 = vld [vmem:[%s3 + $0x88] sm:$0xff]
        %v217 = vld [vmem:[%s3 + $0x90] sm:$0xff]
        %v218 = vld [vmem:[%s3 + $0x98] sm:$0xff]
        %v219 = vld [vmem:[%s3 + $0xa0] sm:$0xff]
        %v220 = vld [vmem:[%s3 + $0xa8] sm:$0xff]
        %v221 = vld [vmem:[%s3 + $0xb0] sm:$0xff]
        %v222 = vld [vmem:[%s3 + $0xb8] sm:$0xff]
        %v223 = vld [vmem:[%s3 + $0xc0] sm:$0xff]
        %v224 = vld [vmem:[%s3 + $0xc8] sm:$0xff]
        %v225 = vld [vmem:[%s3 + $0xd0] sm:$0xff]
        %v226 = vld [vmem:[%s3 + $0xd8] sm:$0xff]
        %v227 = vld [vmem:[%s3 + $0xe0] sm:$0xff]
        %v228 = vld [vmem:[%s3 + $0xe8] sm:$0xff]
        %v229 = vld [vmem:[%s3 + $0xf0] sm:$0xff]
        %v230 = vld [vmem:[%s3 + $0xf8] sm:$0xff]
        %v231 = vld [vmem:[%s3 + $0x100] sm:$0xff]
        %v232 = vld [vmem:[%s3 + $0x108] sm:$0xff]
        %v233 = vld [vmem:[%s3 + $0x110] sm:$0xff]
        %v234 = vld [vmem:[%s3 + $0x118] sm:$0xff]
        %v235 = vld [vmem:[%s3 + $0x120] sm:$0xff]
        %v236 = vld [vmem:[%s3 + $0x128] sm:$0xff]
        %v237 = vld [vmem:[%s3 + $0x130] sm:$0xff]
        %v238 = vld [vmem:[%s3 + $0x138] sm:$0xff]
        %v239 = vld [vmem:[%s3 + $0x140] sm:$0xff]
        %v240 = vld [vmem:[%s3 + $0x148] sm:$0xff]
        %v241 = vld [vmem:[%s3 + $0x150] sm:$0xff]
        %v242 = vld [vmem:[%s3 + $0x158] sm:$0xff]
        %v243 = vld [vmem:[%s3 + $0x160] sm:$0xff]
        %v244 = vld [vmem:[%s3 + $0x168] sm:$0xff]
        %v245 = vld [vmem:[%s3 + $0x170] sm:$0xff]
        %v246 = vld [vmem:[%s3 + $0x178] sm:$0xff]
        %v247 = vld [vmem:[%s3 + $0x180] sm:$0xff]
        %v248 = vld [vmem:[%s3 + $0x188] sm:$0xff]
        %v249 = vld [vmem:[%s3 + $0x190] sm:$0xff]
        %v250 = vld [vmem:[%s3 + $0x198] sm:$0xff]
        %v251 = vld [vmem:[%s3 + $0x1a0] sm:$0xff]
        %v252 = vld [vmem:[%s3 + $0x1a8] sm:$0xff]
        %v253 = vld [vmem:[%s3 + $0x1b0] sm:$0xff]
        %v254 = vld [vmem:[%s3 + $0x1b8] sm:$0xff]
        %v255 = vld [vmem:[%s3 + $0x1c0] sm:$0xff]
        %v256 = vld [vmem:[%s3 + $0x1c8] sm:$0xff]
        %v257 = vld [vmem:[%s3 + $0x1d0] sm:$0xff]
        %v258 = vld [vmem:[%s3 + $0x1d8] sm:$0xff]
        %v259 = vld [vmem:[%s3 + $0x1e0] sm:$0xff]
        %v260 = vld [vmem:[%s3 + $0x1e8] sm:$0xff]
        %v261 = vld [vmem:[%s3 + $0x1f0] sm:$0xff]
        %v262 = vld [vmem:[%s3 + $0x1f8] sm:$0xff]
        %vm263 = vcmask 261120
        %v264 = vsel %vm263, %v193, 0.0
        %265 = vadd.xlane.f32.xlu0 %v264
        %v266 = vpop.xlane.xlu0 %265
        %v267 = vrcp.pop 32.0
        %v268 = vmul.f32 %v266, %v267
        %v269 = vsub.f32 %v193, %v268
        %v270 = vmul.f32 %v269, %v269
        %v271 = vsel %vm263, %v270, 0.0
        %272 = vadd.xlane.f32.xlu0 %v271
        %v273 = vpop.xlane.xlu0 %272
        %v274 = vmul.f32 %v273, %v267
        %v275 = vadd.f32 %v274, 1e-05
        %v276 = vrsqrt.pop %v275
        %v277 = vmul.f32 %v269, %v276
        %v278 = vlaneseq
        %v279 = vshrl.u32 %v278, 7
        %v280 = vsub.s32 0, %v279
        %v281 = vrot.slane %v198, %v280
        %v282 = vmul.f32 %v277, %v281
        %v283 = vlaneseq
        %v284 = vshrl.u32 %v283, 7
        %v285 = vsub.s32 1, %v284
        %v286 = vrot.slane %v198, %v285
        %v287 = vadd.f32 %v282, %v286
        %v289 = vsel %vm263, %v287, 0
        %291 = vmatprep.subr.mxu0 0.0
        %292 = vmatpush1.msra.mxu0 %v194
        %293 = vmatprep.subr.mxu0 0.0
        %294 = vmatpush1.msra.mxu0 %v195
        %295 = vmatprep.subr.mxu0 0.0
        %296 = vmatpush1.msra.mxu0 %v196
        %297 = vmatprep.subr.mxu0 0.0
        %298 = vmatpush1.msra.mxu0 %v197
        %299 = vmatprep.subr.mxu0 0.0
        %300 = vmatpush1.msra.mxu0 0.0
        %301 = vmatprep.subr.mxu0 0.0
        %302 = vmatpush1.msra.mxu0 0.0
        %303 = vmatprep.subr.mxu0 0.0
        %304 = vmatpush1.msra.mxu0 0.0
        %305 = vmatprep.subr.mxu0 0.0
        %306 = vmatpush1.msra.mxu0 0.0
        %307 = vmatprep.subr.mxu0 0.0
        %308 = vmatpush1.msra.mxu0 0.0
        %309 = vmatprep.subr.mxu0 0.0
        %310 = vmatpush1.msra.mxu0 0.0
        %311 = vmatprep.subr.mxu0 0.0
        %312 = vmatpush1.msra.mxu0 0.0
        %313 = vmatprep.subr.mxu0 0.0
        %314 = vmatpush1.msra.mxu0 0.0
        %315 = vmatprep.subr.mxu0 0.0
        %316 = vmatpush1.msra.mxu0 0.0
        %317 = vmatprep.subr.mxu0 0.0
        %318 = vmatpush1.msra.mxu0 0.0
        %319 = vmatprep.subr.mxu0 0.0
        %320 = vmatpush1.msra.mxu0 0.0
        %321 = vmatprep.subr.mxu0 0.0
        %322 = vmatpush1.msra.mxu0 0.0
        %323 = vmatprep.subr.mxu0 0.0
        %324 = vmatpush1.msra.mxu0 0.0
        %325 = vmatprep.subr.mxu0 0.0
        %326 = vmatpush1.msra.mxu0 0.0
        %327 = vmatprep.subr.mxu0 0.0
        %328 = vmatpush1.msra.mxu0 0.0
        %329 = vmatprep.subr.mxu0 0.0
        %330 = vmatpush1.msra.mxu0 0.0
        %331 = vmatprep.subr.mxu0 0.0
        %332 = vmatpush1.msra.mxu0 0.0
        %333 = vmatprep.subr.mxu0 0.0
        %334 = vmatpush1.msra.mxu0 0.0
        %335 = vmatprep.subr.mxu0 0.0
        %336 = vmatpush1.msra.mxu0 0.0
        %337 = vmatprep.subr.mxu0 0.0
        %338 = vmatpush1.msra.mxu0 0.0
        %339 = vmatprep.subr.mxu0 0.0
        %340 = vmatpush1.msra.mxu0 0.0
        %341 = vmatprep.subr.mxu0 0.0
        %342 = vmatpush1.msra.mxu0 0.0
        %343 = vmatprep.subr.mxu0 0.0
        %344 = vmatpush1.msra.mxu0 0.0
        %345 = vmatprep.subr.mxu0 0.0
        %346 = vmatpush1.msra.mxu0 0.0
        %347 = vmatprep.subr.mxu0 0.0
        %348 = vmatpush1.msra.mxu0 0.0
        %349 = vmatprep.subr.mxu0 0.0
        %350 = vmatpush1.msra.mxu0 0.0
        %351 = vmatprep.subr.mxu0 0.0
        %352 = vmatpush1.msra.mxu0 0.0
        %353 = vmatprep.subr.mxu0 0.0
        %354 = vmatpush1.msra.mxu0 0.0
        %355 = vmatprep.mubr.f32.mxu0 0.0
        %356 = vmatmul.mubr.f32.gmra.mrb[0].mxu0 %v289
        %v357 = vpop.f32.mrb[0].mxu0
        %v358 = vadd.f32 0.0, %v357
        %v359 = vpop.f32.mrb[0].mxu0
        %360 = vdwg.mxu0
        %v361 = vlaneseq
        %v362 = vshrl.u32 %v361, 7
        %v363 = vsub.s32 4, %v362
        %v364 = vrot.slane %v198, %v363
        %366 = vrot.lane.b32.xlu0 %v364, 32
        %v367 = vpop.permute.xlu0 %366
        %v369 = vadd.f32 %v358, %v367
        %v370 = vlaneseq
        %v371 = vshrl.u32 %v370, 7
        %v372 = vsub.s32 5, %v371
        %v373 = vrot.slane %v198, %v372
        %375 = vrot.lane.b32.xlu0 %v373, 64
        %v376 = vpop.permute.xlu0 %375
        %v378 = vadd.f32 %v358, %v376
        %v379 = vlaneseq
        %v380 = vshrl.u32 %v379, 7
        %v381 = vsub.s32 2, %v380
        %v382 = vrot.slane %v198, %v381
        %v383 = vadd.f32 %v358, %v382
        %v384 = vmul.f32 %v383, 0.17677669
        %v385 = vlaneseq
        %v386 = vshrl.u32 %v385, 7
        %v387 = vsub.s32 3, %v386
        %v388 = vrot.slane %v198, %v387
        %v389 = vadd.f32 %v358, %v388
        %v390 = vlaneseq
        %v391 = vshrl.u32 %v390, 7
        %v392 = vlaneseq
        %v393 = vand.u32 %v392, 127
        %v394 = vadd.s32 %v391, 1
        %vm395 = vcmp.eq.s32.totalorder %v393, %v394
        %v396 = vsel %vm395, 1, 0
        %v397 = vcvt.s32.f32 %v396
        %vm398 = vcmask 64512
        %v400 = vsel %vm398, %v397, 0
        %402 = vmatprep.subr.mxu0 0.0
        %403 = vmatpush1.msra.mxu0 %v389
        %404 = vmatprep.subr.mxu0 0.0
        %405 = vmatpush1.msra.mxu0 0.0
        %406 = vmatprep.subr.mxu0 0.0
        %407 = vmatpush1.msra.mxu0 0.0
        %408 = vmatprep.subr.mxu0 0.0
        %409 = vmatpush1.msra.mxu0 0.0
        %410 = vmatprep.subr.mxu0 0.0
        %411 = vmatpush1.msra.mxu0 0.0
        %412 = vmatprep.subr.mxu0 0.0
        %413 = vmatpush1.msra.mxu0 0.0
        %414 = vmatprep.subr.mxu0 0.0
        %415 = vmatpush1.msra.mxu0 0.0
        %416 = vmatprep.subr.mxu0 0.0
        %417 = vmatpush1.msra.mxu0 0.0
        %418 = vmatprep.subr.mxu0 0.0
        %419 = vmatpush1.msra.mxu0 0.0
        %420 = vmatprep.subr.mxu0 0.0
        %421 = vmatpush1.msra.mxu0 0.0
        %422 = vmatprep.subr.mxu0 0.0
        %423 = vmatpush1.msra.mxu0 0.0
        %424 = vmatprep.subr.mxu0 0.0
        %425 = vmatpush1.msra.mxu0 0.0
        %426 = vmatprep.subr.mxu0 0.0
        %427 = vmatpush1.msra.mxu0 0.0
        %428 = vmatprep.subr.mxu0 0.0
        %429 = vmatpush1.msra.mxu0 0.0
        %430 = vmatprep.subr.mxu0 0.0
        %431 = vmatpush1.msra.mxu0 0.0
        %432 = vmatprep.subr.mxu0 0.0
        %433 = vmatpush1.msra.mxu0 0.0
        %434 = vmatprep.subr.mxu0 0.0
        %435 = vmatpush1.msra.mxu0 0.0
        %436 = vmatprep.subr.mxu0 0.0
        %437 = vmatpush1.msra.mxu0 0.0
        %438 = vmatprep.subr.mxu0 0.0
        %439 = vmatpush1.msra.mxu0 0.0
        %440 = vmatprep.subr.mxu0 0.0
        %441 = vmatpush1.msra.mxu0 0.0
        %442 = vmatprep.subr.mxu0 0.0
        %443 = vmatpush1.msra.mxu0 0.0
        %444 = vmatprep.subr.mxu0 0.0
        %445 = vmatpush1.msra.mxu0 0.0
        %446 = vmatprep.subr.mxu0 0.0
        %447 = vmatpush1.msra.mxu0 0.0
        %448 = vmatprep.subr.mxu0 0.0
        %449 = vmatpush1.msra.mxu0 0.0
        %450 = vmatprep.subr.mxu0 0.0
        %451 = vmatpush1.msra.mxu0 0.0
        %452 = vmatprep.subr.mxu0 0.0
        %453 = vmatpush1.msra.mxu0 0.0
        %454 = vmatprep.subr.mxu0 0.0
        %455 = vmatpush1.msra.mxu0 0.0
        %456 = vmatprep.subr.mxu0 0.0
        %457 = vmatpush1.msra.mxu0 0.0
        %458 = vmatprep.subr.mxu0 0.0
        %459 = vmatpush1.msra.mxu0 0.0
        %460 = vmatprep.subr.mxu0 0.0
        %461 = vmatpush1.msra.mxu0 0.0
        %462 = vmatprep.subr.mxu0 0.0
        %463 = vmatpush1.msra.mxu0 0.0
        %464 = vmatprep.subr.mxu0 0.0
        %465 = vmatpush1.msra.mxu0 0.0
        %466 = vmatprep.mubr.f32.mxu0 0.0
        %467 = vmatmul.mubr.f32.gmra.mrb[0].mxu0 %v400
        %v468 = vpop.f32.mrb[0].mxu0
        %v469 = vadd.f32 0.0, %v468
        %v470 = vpop.f32.mrb[0].mxu0
        %471 = vdwg.mxu0
        %473 = vrot.lane.b32.xlu0 %v469, 32
        %v474 = vpop.permute.xlu0 %473
        %v476 = vsel %vm263, %v389, %v474
        %478 = vrot.lane.b32.xlu0 %v476, 64
        %v479 = vpop.permute.xlu0 %478
        %vm481 = vcmask 523264
        %v482 = vsel %vm481, %v476, %v479
        %v483 = vadd.s32 %v393, 128
        %v484 = vadd.s32 %v393, 256
        %v485 = vadd.s32 %v393, 384
        %v486 = vmul.u32 %v391, 64
        %vm487 = vcmp.ge.s32.totalorder %v393, %v486
        %vm488 = vcmp.ge.s32.totalorder %v483, %v486
        %vm489 = vcmp.ge.s32.totalorder %v484, %v486
        %vm490 = vcmp.ge.s32.totalorder %v485, %v486
        %v491 = vmul.u32 %v394, 64
        %vm492 = vcmp.lt.s32.totalorder %v393, %v491
        %vm493 = vcmp.lt.s32.totalorder %v483, %v491
        %vm494 = vcmp.lt.s32.totalorder %v484, %v491
        %vm495 = vcmp.lt.s32.totalorder %v485, %v491
        %vm496 = vmand %vm487, %vm492
        %vm497 = vmand %vm488, %vm493
        %vm498 = vmand %vm489, %vm494
        %vm499 = vmand %vm490, %vm495
        %v500 = vsel %vm496, %v482, 0.0
        %v501 = vsel %vm497, %v482, 0.0
        %v502 = vsel %vm498, %v482, 0.0
        %v503 = vsel %vm499, %v482, 0.0
        %504 = vmatprep.subr.mxu0 0.0
        %505 = vmatpush1.msra.mxu0 %v199
        %506 = vmatprep.subr.mxu0 0.0
        %507 = vmatpush1.msra.mxu0 %v200
        %508 = vmatprep.subr.mxu0 0.0
        %509 = vmatpush1.msra.mxu0 %v201
        %510 = vmatprep.subr.mxu0 0.0
        %511 = vmatpush1.msra.mxu0 %v202
        %512 = vmatprep.subr.mxu0 0.0
        %513 = vmatpush1.msra.mxu0 %v203
        %514 = vmatprep.subr.mxu0 0.0
        %515 = vmatpush1.msra.mxu0 %v204
        %516 = vmatprep.subr.mxu0 0.0
        %517 = vmatpush1.msra.mxu0 %v205
        %518 = vmatprep.subr.mxu0 0.0
        %519 = vmatpush1.msra.mxu0 %v206
        %520 = vmatprep.subr.mxu0 0.0
        %521 = vmatpush1.msra.mxu0 %v207
        %522 = vmatprep.subr.mxu0 0.0
        %523 = vmatpush1.msra.mxu0 %v208
        %524 = vmatprep.subr.mxu0 0.0
        %525 = vmatpush1.msra.mxu0 %v209
        %526 = vmatprep.subr.mxu0 0.0
        %527 = vmatpush1.msra.mxu0 %v210
        %528 = vmatprep.subr.mxu0 0.0
        %529 = vmatpush1.msra.mxu0 %v211
        %530 = vmatprep.subr.mxu0 0.0
        %531 = vmatpush1.msra.mxu0 %v212
        %532 = vmatprep.subr.mxu0 0.0
        %533 = vmatpush1.msra.mxu0 %v213
        %534 = vmatprep.subr.mxu0 0.0
        %535 = vmatpush1.msra.mxu0 %v214
        %536 = vmatprep.subr.mxu0 0.0
        %537 = vmatpush1.msra.mxu0 %v215
        %538 = vmatprep.subr.mxu0 0.0
        %539 = vmatpush1.msra.mxu0 %v216
        %540 = vmatprep.subr.mxu0 0.0
        %541 = vmatpush1.msra.mxu0 %v217
        %542 = vmatprep.subr.mxu0 0.0
        %543 = vmatpush1.msra.mxu0 %v218
        %544 = vmatprep.subr.mxu0 0.0
        %545 = vmatpush1.msra.mxu0 %v219
        %546 = vmatprep.subr.mxu0 0.0
        %547 = vmatpush1.msra.mxu0 %v220
        %548 = vmatprep.subr.mxu0 0.0
        %549 = vmatpush1.msra.mxu0 %v221
        %550 = vmatprep.subr.mxu0 0.0
        %551 = vmatpush1.msra.mxu0 %v222
        %552 = vmatprep.subr.mxu0 0.0
        %553 = vmatpush1.msra.mxu0 %v223
        %554 = vmatprep.subr.mxu0 0.0
        %555 = vmatpush1.msra.mxu0 %v224
        %556 = vmatprep.subr.mxu0 0.0
        %557 = vmatpush1.msra.mxu0 %v225
        %558 = vmatprep.subr.mxu0 0.0
        %559 = vmatpush1.msra.mxu0 %v226
        %560 = vmatprep.subr.mxu0 0.0
        %561 = vmatpush1.msra.mxu0 %v227
        %562 = vmatprep.subr.mxu0 0.0
        %563 = vmatpush1.msra.mxu0 %v228
        %564 = vmatprep.subr.mxu0 0.0
        %565 = vmatpush1.msra.mxu0 %v229
        %566 = vmatprep.subr.mxu0 0.0
        %567 = vmatpush1.msra.mxu0 %v230
        %568 = vmatprep.mubr.f32.mxu0 %v501
        %569 = vmatmul.mubr.f32.gmra.mrb[0].mxu0 %v500
        %v570 = vpop.f32.mrb[0].mxu0
        %v571 = vadd.f32 0.0, %v570
        %v572 = vpop.f32.mrb[0].mxu0
        %573 = vdwg.mxu0
        %574 = vmatprep.subr.mxu0 0.0
        %575 = vmatpush1.msra.mxu0 %v231
        %576 = vmatprep.subr.mxu0 0.0
        %577 = vmatpush1.msra.mxu0 %v232
        %578 = vmatprep.subr.mxu0 0.0
        %579 = vmatpush1.msra.mxu0 %v233
        %580 = vmatprep.subr.mxu0 0.0
        %581 = vmatpush1.msra.mxu0 %v234
        %582 = vmatprep.subr.mxu0 0.0
        %583 = vmatpush1.msra.mxu0 %v235
        %584 = vmatprep.subr.mxu0 0.0
        %585 = vmatpush1.msra.mxu0 %v236
        %586 = vmatprep.subr.mxu0 0.0
        %587 = vmatpush1.msra.mxu0 %v237
        %588 = vmatprep.subr.mxu0 0.0
        %589 = vmatpush1.msra.mxu0 %v238
        %590 = vmatprep.subr.mxu0 0.0
        %591 = vmatpush1.msra.mxu0 %v239
        %592 = vmatprep.subr.mxu0 0.0
        %593 = vmatpush1.msra.mxu0 %v240
        %594 = vmatprep.subr.mxu0 0.0
        %595 = vmatpush1.msra.mxu0 %v241
        %596 = vmatprep.subr.mxu0 0.0
        %597 = vmatpush1.msra.mxu0 %v242
        %598 = vmatprep.subr.mxu0 0.0
        %599 = vmatpush1.msra.mxu0 %v243
        %600 = vmatprep.subr.mxu0 0.0
        %601 = vmatpush1.msra.mxu0 %v244
        %602 = vmatprep.subr.mxu0 0.0
        %603 = vmatpush1.msra.mxu0 %v245
        %604 = vmatprep.subr.mxu0 0.0
        %605 = vmatpush1.msra.mxu0 %v246
        %606 = vmatprep.subr.mxu0 0.0
        %607 = vmatpush1.msra.mxu0 %v247
        %608 = vmatprep.subr.mxu0 0.0
        %609 = vmatpush1.msra.mxu0 %v248
        %610 = vmatprep.subr.mxu0 0.0
        %611 = vmatpush1.msra.mxu0 %v249
        %612 = vmatprep.subr.mxu0 0.0
        %613 = vmatpush1.msra.mxu0 %v250
        %614 = vmatprep.subr.mxu0 0.0
        %615 = vmatpush1.msra.mxu0 %v251
        %616 = vmatprep.subr.mxu0 0.0
        %617 = vmatpush1.msra.mxu0 %v252
        %618 = vmatprep.subr.mxu0 0.0
        %619 = vmatpush1.msra.mxu0 %v253
        %620 = vmatprep.subr.mxu0 0.0
        %621 = vmatpush1.msra.mxu0 %v254
        %622 = vmatprep.subr.mxu0 0.0
        %623 = vmatpush1.msra.mxu0 %v255
        %624 = vmatprep.subr.mxu0 0.0
        %625 = vmatpush1.msra.mxu0 %v256
        %626 = vmatprep.subr.mxu0 0.0
        %627 = vmatpush1.msra.mxu0 %v257
        %628 = vmatprep.subr.mxu0 0.0
        %629 = vmatpush1.msra.mxu0 %v258
        %630 = vmatprep.subr.mxu0 0.0
        %631 = vmatpush1.msra.mxu0 %v259
        %632 = vmatprep.subr.mxu0 0.0
        %633 = vmatpush1.msra.mxu0 %v260
        %634 = vmatprep.subr.mxu0 0.0
        %635 = vmatpush1.msra.mxu0 %v261
        %636 = vmatprep.subr.mxu0 0.0
        %637 = vmatpush1.msra.mxu0 %v262
        %638 = vmatprep.mubr.f32.mxu0 %v503
        %639 = vmatmul.mubr.f32.gmra.mrb[0].mxu0 %v502
        %v640 = vpop.f32.mrb[0].mxu0
        %v641 = vadd.f32 %v571, %v640
        %v642 = vpop.f32.mrb[0].mxu0
        %643 = vdwg.mxu0
        %645 = vrot.lane.b32.xlu0 %v384, 120
        %v646 = vpop.permute.xlu0 %645
        %647 = vrot.lane.b32.xlu0 %v384, 112
        %v648 = vpop.permute.xlu0 %647
        %649 = vrot.lane.b32.xlu0 %v384, 104
        %v650 = vpop.permute.xlu0 %649
        %652 = vrot.lane.b32.xlu0 %v369, 120
        %v653 = vpop.permute.xlu0 %652
        %654 = vrot.lane.b32.xlu0 %v369, 112
        %v655 = vpop.permute.xlu0 %654
        %656 = vrot.lane.b32.xlu0 %v369, 104
        %v657 = vpop.permute.xlu0 %656
        %659 = vrot.lane.b32.xlu0 %v378, 120
        %v660 = vpop.permute.xlu0 %659
        %661 = vrot.lane.b32.xlu0 %v378, 112
        %v662 = vpop.permute.xlu0 %661
        %663 = vrot.lane.b32.xlu0 %v378, 104
        %v664 = vpop.permute.xlu0 %663
        %666 = vrot.lane.b32.xlu0 %v641, 120
        %v667 = vpop.permute.xlu0 %666
        %669 = vrot.lane.b32.xlu0 %v641, 112
        %v670 = vpop.permute.xlu0 %669
        %672 = vrot.lane.b32.xlu0 %v641, 104
        %v673 = vpop.permute.xlu0 %672
        %675 = vrot.lane.b32.xlu0 %v369, 96
        %v676 = vpop.permute.xlu0 %675
        %v677 = vsel %vm398, %v384, 0
        %v679 = vsel %vm398, %v676, 0
        %681 = vmatprep.subr.mxu0 0.0
        %682 = vmatpush1.xpose.msra.mxu0 %v679
        %683 = vmatprep.subr.mxu0 0.0
        %684 = vmatpush1.xpose.msra.mxu0 0.0
        %685 = vmatprep.subr.mxu0 0.0
        %686 = vmatpush1.xpose.msra.mxu0 0.0
        %687 = vmatprep.subr.mxu0 0.0
        %688 = vmatpush1.xpose.msra.mxu0 0.0
        %689 = vmatprep.subr.mxu0 0.0
        %690 = vmatpush1.xpose.msra.mxu0 0.0
        %691 = vmatprep.subr.mxu0 0.0
        %692 = vmatpush1.xpose.msra.mxu0 0.0
        %693 = vmatprep.subr.mxu0 0.0
        %694 = vmatpush1.xpose.msra.mxu0 0.0
        %695 = vmatprep.subr.mxu0 0.0
        %696 = vmatpush1.xpose.msra.mxu0 0.0
        %697 = vmatprep.subr.mxu0 0.0
        %698 = vmatpush1.xpose.msra.mxu0 0.0
        %699 = vmatprep.subr.mxu0 0.0
        %700 = vmatpush1.xpose.msra.mxu0 0.0
        %701 = vmatprep.subr.mxu0 0.0
        %702 = vmatpush1.xpose.msra.mxu0 0.0
        %703 = vmatprep.subr.mxu0 0.0
        %704 = vmatpush1.xpose.msra.mxu0 0.0
        %705 = vmatprep.subr.mxu0 0.0
        %706 = vmatpush1.xpose.msra.mxu0 0.0
        %707 = vmatprep.subr.mxu0 0.0
        %708 = vmatpush1.xpose.msra.mxu0 0.0
        %709 = vmatprep.subr.mxu0 0.0
        %710 = vmatpush1.xpose.msra.mxu0 0.0
        %711 = vmatprep.subr.mxu0 0.0
        %712 = vmatpush1.xpose.msra.mxu0 0.0
        %713 = vmatprep.subr.mxu0 0.0
        %714 = vmatpush1.xpose.msra.mxu0 0.0
        %715 = vmatprep.subr.mxu0 0.0
        %716 = vmatpush1.xpose.msra.mxu0 0.0
        %717 = vmatprep.subr.mxu0 0.0
        %718 = vmatpush1.xpose.msra.mxu0 0.0
        %719 = vmatprep.subr.mxu0 0.0
        %720 = vmatpush1.xpose.msra.mxu0 0.0
        %721 = vmatprep.subr.mxu0 0.0
        %722 = vmatpush1.xpose.msra.mxu0 0.0
        %723 = vmatprep.subr.mxu0 0.0
        %724 = vmatpush1.xpose.msra.mxu0 0.0
        %725 = vmatprep.subr.mxu0 0.0
        %726 = vmatpush1.xpose.msra.mxu0 0.0
        %727 = vmatprep.subr.mxu0 0.0
        %728 = vmatpush1.xpose.msra.mxu0 0.0
        %729 = vmatprep.subr.mxu0 0.0
        %730 = vmatpush1.xpose.msra.mxu0 0.0
        %731 = vmatprep.subr.mxu0 0.0
        %732 = vmatpush1.xpose.msra.mxu0 0.0
        %733 = vmatprep.subr.mxu0 0.0
        %734 = vmatpush1.xpose.msra.mxu0 0.0
        %735 = vmatprep.subr.mxu0 0.0
        %736 = vmatpush1.xpose.msra.mxu0 0.0
        %737 = vmatprep.subr.mxu0 0.0
        %738 = vmatpush1.xpose.msra.mxu0 0.0
        %739 = vmatprep.subr.mxu0 0.0
        %740 = vmatpush1.xpose.msra.mxu0 0.0
        %741 = vmatprep.subr.mxu0 0.0
        %742 = vmatpush1.xpose.msra.mxu0 0.0
        %743 = vmatprep.subr.mxu0 0.0
        %744 = vmatpush1.xpose.msra.mxu0 0.0
        %745 = vmatprep.mubr.f32.mxu0 0.0
        %746 = vmatmul.mubr.f32.gmra.mrb[0].mxu0 %v677
        %v747 = vpop.f32.mrb[0].mxu0
        %v748 = vadd.f32 %v641, %v747
        %v749 = vpop.f32.mrb[0].mxu0
        %750 = vdwg.mxu0
        %751 = vrot.lane.b32.xlu0 %v653, 96
        %v752 = vpop.permute.xlu0 %751
        %v753 = vsel %vm398, %v646, 0
        %v755 = vsel %vm398, %v752, 0
        %757 = vmatprep.subr.mxu0 0.0
        %758 = vmatpush1.xpose.msra.mxu0 %v755
        %759 = vmatprep.subr.mxu0 0.0
        %760 = vmatpush1.xpose.msra.mxu0 0.0
        %761 = vmatprep.subr.mxu0 0.0
        %762 = vmatpush1.xpose.msra.mxu0 0.0
        %763 = vmatprep.subr.mxu0 0.0
        %764 = vmatpush1.xpose.msra.mxu0 0.0
        %765 = vmatprep.subr.mxu0 0.0
        %766 = vmatpush1.xpose.msra.mxu0 0.0
        %767 = vmatprep.subr.mxu0 0.0
        %768 = vmatpush1.xpose.msra.mxu0 0.0
        %769 = vmatprep.subr.mxu0 0.0
        %770 = vmatpush1.xpose.msra.mxu0 0.0
        %771 = vmatprep.subr.mxu0 0.0
        %772 = vmatpush1.xpose.msra.mxu0 0.0
        %773 = vmatprep.subr.mxu0 0.0
        %774 = vmatpush1.xpose.msra.mxu0 0.0
        %775 = vmatprep.subr.mxu0 0.0
        %776 = vmatpush1.xpose.msra.mxu0 0.0
        %777 = vmatprep.subr.mxu0 0.0
        %778 = vmatpush1.xpose.msra.mxu0 0.0
        %779 = vmatprep.subr.mxu0 0.0
        %780 = vmatpush1.xpose.msra.mxu0 0.0
        %781 = vmatprep.subr.mxu0 0.0
        %782 = vmatpush1.xpose.msra.mxu0 0.0
        %783 = vmatprep.subr.mxu0 0.0
        %784 = vmatpush1.xpose.msra.mxu0 0.0
        %785 = vmatprep.subr.mxu0 0.0
        %786 = vmatpush1.xpose.msra.mxu0 0.0
        %787 = vmatprep.subr.mxu0 0.0
        %788 = vmatpush1.xpose.msra.mxu0 0.0
        %789 = vmatprep.subr.mxu0 0.0
        %790 = vmatpush1.xpose.msra.mxu0 0.0
        %791 = vmatprep.subr.mxu0 0.0
        %792 = vmatpush1.xpose.msra.mxu0 0.0
        %793 = vmatprep.subr.mxu0 0.0
        %794 = vmatpush1.xpose.msra.mxu0 0.0
        %795 = vmatprep.subr.mxu0 0.0
        %796 = vmatpush1.xpose.msra.mxu0 0.0
        %797 = vmatprep.subr.mxu0 0.0
        %798 = vmatpush1.xpose.msra.mxu0 0.0
        %799 = vmatprep.subr.mxu0 0.0
        %800 = vmatpush1.xpose.msra.mxu0 0.0
        %801 = vmatprep.subr.mxu0 0.0
        %802 = vmatpush1.xpose.msra.mxu0 0.0
        %803 = vmatprep.subr.mxu0 0.0
        %804 = vmatpush1.xpose.msra.mxu0 0.0
        %805 = vmatprep.subr.mxu0 0.0
        %806 = vmatpush1.xpose.msra.mxu0 0.0
        %807 = vmatprep.subr.mxu0 0.0
        %808 = vmatpush1.xpose.msra.mxu0 0.0
        %809 = vmatprep.subr.mxu0 0.0
        %810 = vmatpush1.xpose.msra.mxu0 0.0
        %811 = vmatprep.subr.mxu0 0.0
        %812 = vmatpush1.xpose.msra.mxu0 0.0
        %813 = vmatprep.subr.mxu0 0.0
        %814 = vmatpush1.xpose.msra.mxu0 0.0
        %815 = vmatprep.subr.mxu0 0.0
        %816 = vmatpush1.xpose.msra.mxu0 0.0
        %817 = vmatprep.subr.mxu0 0.0
        %818 = vmatpush1.xpose.msra.mxu0 0.0
        %819 = vmatprep.subr.mxu0 0.0
        %820 = vmatpush1.xpose.msra.mxu0 0.0
        %821 = vmatprep.mubr.f32.mxu0 0.0
        %822 = vmatmul.mubr.f32.gmra.mrb[0].mxu0 %v753
        %v823 = vpop.f32.mrb[0].mxu0
        %v824 = vadd.f32 %v667, %v823
        %v825 = vpop.f32.mrb[0].mxu0
        %826 = vdwg.mxu0
        %827 = vrot.lane.b32.xlu0 %v655, 96
        %v828 = vpop.permute.xlu0 %827
        %v829 = vsel %vm398, %v648, 0
        %v831 = vsel %vm398, %v828, 0
        %833 = vmatprep.subr.mxu0 0.0
        %834 = vmatpush1.xpose.msra.mxu0 %v831
        %835 = vmatprep.subr.mxu0 0.0
        %836 = vmatpush1.xpose.msra.mxu0 0.0
        %837 = vmatprep.subr.mxu0 0.0
        %838 = vmatpush1.xpose.msra.mxu0 0.0
        %839 = vmatprep.subr.mxu0 0.0
        %840 = vmatpush1.xpose.msra.mxu0 0.0
        %841 = vmatprep.subr.mxu0 0.0
        %842 = vmatpush1.xpose.msra.mxu0 0.0
        %843 = vmatprep.subr.mxu0 0.0
        %844 = vmatpush1.xpose.msra.mxu0 0.0
        %845 = vmatprep.subr.mxu0 0.0
        %846 = vmatpush1.xpose.msra.mxu0 0.0
        %847 = vmatprep.subr.mxu0 0.0
        %848 = vmatpush1.xpose.msra.mxu0 0.0
        %849 = vmatprep.subr.mxu0 0.0
        %850 = vmatpush1.xpose.msra.mxu0 0.0
        %851 = vmatprep.subr.mxu0 0.0
        %852 = vmatpush1.xpose.msra.mxu0 0.0
        %853 = vmatprep.subr.mxu0 0.0
        %854 = vmatpush1.xpose.msra.mxu0 0.0
        %855 = vmatprep.subr.mxu0 0.0
        %856 = vmatpush1.xpose.msra.mxu0 0.0
        %857 = vmatprep.subr.mxu0 0.0
        %858 = vmatpush1.xpose.msra.mxu0 0.0
        %859 = vmatprep.subr.mxu0 0.0
        %860 = vmatpush1.xpose.msra.mxu0 0.0
        %861 = vmatprep.subr.mxu0 0.0
        %862 = vmatpush1.xpose.msra.mxu0 0.0
        %863 = vmatprep.subr.mxu0 0.0
        %864 = vmatpush1.xpose.msra.mxu0 0.0
        %865 = vmatprep.subr.mxu0 0.0
        %866 = vmatpush1.xpose.msra.mxu0 0.0
        %867 = vmatprep.subr.mxu0 0.0
        %868 = vmatpush1.xpose.msra.mxu0 0.0
        %869 = vmatprep.subr.mxu0 0.0
        %870 = vmatpush1.xpose.msra.mxu0 0.0
        %871 = vmatprep.subr.mxu0 0.0
        %872 = vmatpush1.xpose.msra.mxu0 0.0
        %873 = vmatprep.subr.mxu0 0.0
        %874 = vmatpush1.xpose.msra.mxu0 0.0
        %875 = vmatprep.subr.mxu0 0.0
        %876 = vmatpush1.xpose.msra.mxu0 0.0
        %877 = vmatprep.subr.mxu0 0.0
        %878 = vmatpush1.xpose.msra.mxu0 0.0
        %879 = vmatprep.subr.mxu0 0.0
        %880 = vmatpush1.xpose.msra.mxu0 0.0
        %881 = vmatprep.subr.mxu0 0.0
        %882 = vmatpush1.xpose.msra.mxu0 0.0
        %883 = vmatprep.subr.mxu0 0.0
        %884 = vmatpush1.xpose.msra.mxu0 0.0
        %885 = vmatprep.subr.mxu0 0.0
        %886 = vmatpush1.xpose.msra.mxu0 0.0
        %887 = vmatprep.subr.mxu0 0.0
        %888 = vmatpush1.xpose.msra.mxu0 0.0
        %889 = vmatprep.subr.mxu0 0.0
        %890 = vmatpush1.xpose.msra.mxu0 0.0
        %891 = vmatprep.subr.mxu0 0.0
        %892 = vmatpush1.xpose.msra.mxu0 0.0
        %893 = vmatprep.subr.mxu0 0.0
        %894 = vmatpush1.xpose.msra.mxu0 0.0
        %895 = vmatprep.subr.mxu0 0.0
        %896 = vmatpush1.xpose.msra.mxu0 0.0
        %897 = vmatprep.mubr.f32.mxu0 0.0
        %898 = vmatmul.mubr.f32.gmra.mrb[0].mxu0 %v829
        %v899 = vpop.f32.mrb[0].mxu0
        %v900 = vadd.f32 %v670, %v899
        %v901 = vpop.f32.mrb[0].mxu0
        %902 = vdwg.mxu0
        %903 = vrot.lane.b32.xlu0 %v657, 96
        %v904 = vpop.permute.xlu0 %903
        %v905 = vsel %vm398, %v650, 0
        %v907 = vsel %vm398, %v904, 0
        %909 = vmatprep.subr.mxu0 0.0
        %910 = vmatpush1.xpose.msra.mxu0 %v907
        %911 = vmatprep.subr.mxu0 0.0
        %912 = vmatpush1.xpose.msra.mxu0 0.0
        %913 = vmatprep.subr.mxu0 0.0
        %914 = vmatpush1.xpose.msra.mxu0 0.0
        %915 = vmatprep.subr.mxu0 0.0
        %916 = vmatpush1.xpose.msra.mxu0 0.0
        %917 = vmatprep.subr.mxu0 0.0
        %918 = vmatpush1.xpose.msra.mxu0 0.0
        %919 = vmatprep.subr.mxu0 0.0
        %920 = vmatpush1.xpose.msra.mxu0 0.0
        %921 = vmatprep.subr.mxu0 0.0
        %922 = vmatpush1.xpose.msra.mxu0 0.0
        %923 = vmatprep.subr.mxu0 0.0
        %924 = vmatpush1.xpose.msra.mxu0 0.0
        %925 = vmatprep.subr.mxu0 0.0
        %926 = vmatpush1.xpose.msra.mxu0 0.0
        %927 = vmatprep.subr.mxu0 0.0
        %928 = vmatpush1.xpose.msra.mxu0 0.0
        %929 = vmatprep.subr.mxu0 0.0
        %930 = vmatpush1.xpose.msra.mxu0 0.0
        %931 = vmatprep.subr.mxu0 0.0
        %932 = vmatpush1.xpose.msra.mxu0 0.0
        %933 = vmatprep.subr.mxu0 0.0
        %934 = vmatpush1.xpose.msra.mxu0 0.0
        %935 = vmatprep.subr.mxu0 0.0
        %936 = vmatpush1.xpose.msra.mxu0 0.0
        %937 = vmatprep.subr.mxu0 0.0
        %938 = vmatpush1.xpose.msra.mxu0 0.0
        %939 = vmatprep.subr.mxu0 0.0
        %940 = vmatpush1.xpose.msra.mxu0 0.0
        %941 = vmatprep.subr.mxu0 0.0
        %942 = vmatpush1.xpose.msra.mxu0 0.0
        %943 = vmatprep.subr.mxu0 0.0
        %944 = vmatpush1.xpose.msra.mxu0 0.0
        %945 = vmatprep.subr.mxu0 0.0
        %946 = vmatpush1.xpose.msra.mxu0 0.0
        %947 = vmatprep.subr.mxu0 0.0
        %948 = vmatpush1.xpose.msra.mxu0 0.0
        %949 = vmatprep.subr.mxu0 0.0
        %950 = vmatpush1.xpose.msra.mxu0 0.0
        %951 = vmatprep.subr.mxu0 0.0
        %952 = vmatpush1.xpose.msra.mxu0 0.0
        %953 = vmatprep.subr.mxu0 0.0
        %954 = vmatpush1.xpose.msra.mxu0 0.0
        %955 = vmatprep.subr.mxu0 0.0
        %956 = vmatpush1.xpose.msra.mxu0 0.0
        %957 = vmatprep.subr.mxu0 0.0
        %958 = vmatpush1.xpose.msra.mxu0 0.0
        %959 = vmatprep.subr.mxu0 0.0
        %960 = vmatpush1.xpose.msra.mxu0 0.0
        %961 = vmatprep.subr.mxu0 0.0
        %962 = vmatpush1.xpose.msra.mxu0 0.0
        %963 = vmatprep.subr.mxu0 0.0
        %964 = vmatpush1.xpose.msra.mxu0 0.0
        %965 = vmatprep.subr.mxu0 0.0
        %966 = vmatpush1.xpose.msra.mxu0 0.0
        %967 = vmatprep.subr.mxu0 0.0
        %968 = vmatpush1.xpose.msra.mxu0 0.0
        %969 = vmatprep.subr.mxu0 0.0
        %970 = vmatpush1.xpose.msra.mxu0 0.0
        %971 = vmatprep.subr.mxu0 0.0
        %972 = vmatpush1.xpose.msra.mxu0 0.0
        %973 = vmatprep.mubr.f32.mxu0 0.0
        %974 = vmatmul.mubr.f32.gmra.mrb[0].mxu0 %v905
        %v975 = vpop.f32.mrb[0].mxu0
        %v976 = vadd.f32 %v673, %v975
        %v977 = vpop.f32.mrb[0].mxu0
        %978 = vdwg.mxu0
        %v979 = vsel %vm398, %v748, -inf
        %980 = vmax.xlane.f32.xlu0 %v979
        %v981 = vpop.xlane.xlu0 %980
        %v982 = vsel %vm398, %v824, -inf
        %983 = vmax.xlane.f32.xlu0 %v982
        %v984 = vpop.xlane.xlu0 %983
        %v985 = vsel %vm398, %v900, -inf
        %986 = vmax.xlane.f32.xlu0 %v985
        %v987 = vpop.xlane.xlu0 %986
        %v988 = vsel %vm398, %v976, -inf
        %989 = vmax.xlane.f32.xlu0 %v988
        %v990 = vpop.xlane.xlu0 %989
        %v991 = vsub.f32 %v748, %v981
        %v992 = vsub.f32 %v824, %v984
        %v993 = vsub.f32 %v900, %v987
        %v994 = vsub.f32 %v976, %v990
        %v995 = vmul.f32 %v991, 1.442695
        %v996 = vpow.pop %v995
        %v997 = vmul.f32 %v992, 1.442695
        %v998 = vpow.pop %v997
        %v999 = vmul.f32 %v993, 1.442695
        %v1000 = vpow.pop %v999
        %v1001 = vmul.f32 %v994, 1.442695
        %v1002 = vpow.pop %v1001
        %v1003 = vsel %vm398, %v996, 0.0
        %1004 = vadd.xlane.f32.xlu0 %v1003
        %v1005 = vpop.xlane.xlu0 %1004
        %v1006 = vsel %vm398, %v998, 0.0
        %1007 = vadd.xlane.f32.xlu0 %v1006
        %v1008 = vpop.xlane.xlu0 %1007
        %v1009 = vsel %vm398, %v1000, 0.0
        %1010 = vadd.xlane.f32.xlu0 %v1009
        %v1011 = vpop.xlane.xlu0 %1010
        %v1012 = vsel %vm398, %v1002, 0.0
        %1013 = vadd.xlane.f32.xlu0 %v1012
        %v1014 = vpop.xlane.xlu0 %1013
        %v1015 = vrcp.pop %v1005
        %v1016 = vrcp.pop %v1008
        %v1017 = vrcp.pop %v1011
        %v1018 = vrcp.pop %v1014
        %v1019 = vmul.f32 %v1005, %v1015
        %v1020 = vmul.f32 %v1008, %v1016
        %v1021 = vmul.f32 %v1011, %v1017
        %v1022 = vmul.f32 %v1014, %v1018
        %v1023 = vsub.f32 2.0, %v1019
        %v1024 = vsub.f32 2.0, %v1020
        %v1025 = vsub.f32 2.0, %v1021
        %v1026 = vsub.f32 2.0, %v1022
        %v1027 = vmul.f32 %v1015, %v1023
        %v1028 = vmul.f32 %v1016, %v1024
        %v1029 = vmul.f32 %v1017, %v1025
        %v1030 = vmul.f32 %v1018, %v1026
        %v1031 = vmul.f32 %v996, %v1027
        %v1032 = vmul.f32 %v998, %v1028
        %v1033 = vmul.f32 %v1000, %v1029
        %v1034 = vmul.f32 %v1002, %v1030
        %1035 = vrot.lane.b32.xlu0 %v378, 64
        %v1036 = vpop.permute.xlu0 %1035
        %v1039 = vsel %vm398, %v1031, 0
        %1041 = vmatprep.subr.mxu0 0.0
        %1042 = vmatpush1.msra.mxu0 %v1036
        %1043 = vmatprep.subr.mxu0 0.0
        %1044 = vmatpush1.msra.mxu0 0.0
        %1045 = vmatprep.subr.mxu0 0.0
        %1046 = vmatpush1.msra.mxu0 0.0
        %1047 = vmatprep.subr.mxu0 0.0
        %1048 = vmatpush1.msra.mxu0 0.0
        %1049 = vmatprep.subr.mxu0 0.0
        %1050 = vmatpush1.msra.mxu0 0.0
        %1051 = vmatprep.subr.mxu0 0.0
        %1052 = vmatpush1.msra.mxu0 0.0
        %1053 = vmatprep.subr.mxu0 0.0
        %1054 = vmatpush1.msra.mxu0 0.0
        %1055 = vmatprep.subr.mxu0 0.0
        %1056 = vmatpush1.msra.mxu0 0.0
        %1057 = vmatprep.subr.mxu0 0.0
        %1058 = vmatpush1.msra.mxu0 0.0
        %1059 = vmatprep.subr.mxu0 0.0
        %1060 = vmatpush1.msra.mxu0 0.0
        %1061 = vmatprep.subr.mxu0 0.0
        %1062 = vmatpush1.msra.mxu0 0.0
        %1063 = vmatprep.subr.mxu0 0.0
        %1064 = vmatpush1.msra.mxu0 0.0
        %1065 = vmatprep.subr.mxu0 0.0
        %1066 = vmatpush1.msra.mxu0 0.0
        %1067 = vmatprep.subr.mxu0 0.0
        %1068 = vmatpush1.msra.mxu0 0.0
        %1069 = vmatprep.subr.mxu0 0.0
        %1070 = vmatpush1.msra.mxu0 0.0
        %1071 = vmatprep.subr.mxu0 0.0
        %1072 = vmatpush1.msra.mxu0 0.0
        %1073 = vmatprep.subr.mxu0 0.0
        %1074 = vmatpush1.msra.mxu0 0.0
        %1075 = vmatprep.subr.mxu0 0.0
        %1076 = vmatpush1.msra.mxu0 0.0
        %1077 = vmatprep.subr.mxu0 0.0
        %1078 = vmatpush1.msra.mxu0 0.0
        %1079 = vmatprep.subr.mxu0 0.0
        %1080 = vmatpush1.msra.mxu0 0.0
        %1081 = vmatprep.subr.mxu0 0.0
        %1082 = vmatpush1.msra.mxu0 0.0
        %1083 = vmatprep.subr.mxu0 0.0
        %1084 = vmatpush1.msra.mxu0 0.0
        %1085 = vmatprep.subr.mxu0 0.0
        %1086 = vmatpush1.msra.mxu0 0.0
        %1087 = vmatprep.subr.mxu0 0.0
        %1088 = vmatpush1.msra.mxu0 0.0
        %1089 = vmatprep.subr.mxu0 0.0
        %1090 = vmatpush1.msra.mxu0 0.0
        %1091 = vmatprep.subr.mxu0 0.0
        %1092 = vmatpush1.msra.mxu0 0.0
        %1093 = vmatprep.subr.mxu0 0.0
        %1094 = vmatpush1.msra.mxu0 0.0
        %1095 = vmatprep.subr.mxu0 0.0
        %1096 = vmatpush1.msra.mxu0 0.0
        %1097 = vmatprep.subr.mxu0 0.0
        %1098 = vmatpush1.msra.mxu0 0.0
        %1099 = vmatprep.subr.mxu0 0.0
        %1100 = vmatpush1.msra.mxu0 0.0
        %1101 = vmatprep.subr.mxu0 0.0
        %1102 = vmatpush1.msra.mxu0 0.0
        %1103 = vmatprep.subr.mxu0 0.0
        %1104 = vmatpush1.msra.mxu0 0.0
        %1105 = vmatprep.mubr.f32.mxu0 0.0
        %1106 = vmatmul.mubr.f32.gmra.mrb[0].mxu0 %v1039
        %v1107 = vpop.f32.mrb[0].mxu0
        %v1108 = vadd.f32 0.0, %v1107
        %v1109 = vpop.f32.mrb[0].mxu0
        %1110 = vdwg.mxu0
        %1111 = vrot.lane.b32.xlu0 %v660, 64
        %v1112 = vpop.permute.xlu0 %1111
        %v1115 = vsel %vm398, %v1032, 0
        %1117 = vmatprep.subr.mxu0 0.0
        %1118 = vmatpush1.msra.mxu0 %v1112
        %1119 = vmatprep.subr.mxu0 0.0
        %1120 = vmatpush1.msra.mxu0 0.0
        %1121 = vmatprep.subr.mxu0 0.0
        %1122 = vmatpush1.msra.mxu0 0.0
        %1123 = vmatprep.subr.mxu0 0.0
        %1124 = vmatpush1.msra.mxu0 0.0
        %1125 = vmatprep.subr.mxu0 0.0
        %1126 = vmatpush1.msra.mxu0 0.0
        %1127 = vmatprep.subr.mxu0 0.0
        %1128 = vmatpush1.msra.mxu0 0.0
        %1129 = vmatprep.subr.mxu0 0.0
        %1130 = vmatpush1.msra.mxu0 0.0
        %1131 = vmatprep.subr.mxu0 0.0
        %1132 = vmatpush1.msra.mxu0 0.0
        %1133 = vmatprep.subr.mxu0 0.0
        %1134 = vmatpush1.msra.mxu0 0.0
        %1135 = vmatprep.subr.mxu0 0.0
        %1136 = vmatpush1.msra.mxu0 0.0
        %1137 = vmatprep.subr.mxu0 0.0
        %1138 = vmatpush1.msra.mxu0 0.0
        %1139 = vmatprep.subr.mxu0 0.0
        %1140 = vmatpush1.msra.mxu0 0.0
        %1141 = vmatprep.subr.mxu0 0.0
        %1142 = vmatpush1.msra.mxu0 0.0
        %1143 = vmatprep.subr.mxu0 0.0
        %1144 = vmatpush1.msra.mxu0 0.0
        %1145 = vmatprep.subr.mxu0 0.0
        %1146 = vmatpush1.msra.mxu0 0.0
        %1147 = vmatprep.subr.mxu0 0.0
        %1148 = vmatpush1.msra.mxu0 0.0
        %1149 = vmatprep.subr.mxu0 0.0
        %1150 = vmatpush1.msra.mxu0 0.0
        %1151 = vmatprep.subr.mxu0 0.0
        %1152 = vmatpush1.msra.mxu0 0.0
        %1153 = vmatprep.subr.mxu0 0.0
        %1154 = vmatpush1.msra.mxu0 0.0
        %1155 = vmatprep.subr.mxu0 0.0
        %1156 = vmatpush1.msra.mxu0 0.0
        %1157 = vmatprep.subr.mxu0 0.0
        %1158 = vmatpush1.msra.mxu0 0.0
        %1159 = vmatprep.subr.mxu0 0.0
        %1160 = vmatpush1.msra.mxu0 0.0
        %1161 = vmatprep.subr.mxu0 0.0
        %1162 = vmatpush1.msra.mxu0 0.0
        %1163 = vmatprep.subr.mxu0 0.0
        %1164 = vmatpush1.msra.mxu0 0.0
        %1165 = vmatprep.subr.mxu0 0.0
        %1166 = vmatpush1.msra.mxu0 0.0
        %1167 = vmatprep.subr.mxu0 0.0
        %1168 = vmatpush1.msra.mxu0 0.0
        %1169 = vmatprep.subr.mxu0 0.0
        %1170 = vmatpush1.msra.mxu0 0.0
        %1171 = vmatprep.subr.mxu0 0.0
        %1172 = vmatpush1.msra.mxu0 0.0
        %1173 = vmatprep.subr.mxu0 0.0
        %1174 = vmatpush1.msra.mxu0 0.0
        %1175 = vmatprep.subr.mxu0 0.0
        %1176 = vmatpush1.msra.mxu0 0.0
        %1177 = vmatprep.subr.mxu0 0.0
        %1178 = vmatpush1.msra.mxu0 0.0
        %1179 = vmatprep.subr.mxu0 0.0
        %1180 = vmatpush1.msra.mxu0 0.0
        %1181 = vmatprep.mubr.f32.mxu0 0.0
        %1182 = vmatmul.mubr.f32.gmra.mrb[0].mxu0 %v1115
        %v1183 = vpop.f32.mrb[0].mxu0
        %v1184 = vadd.f32 0.0, %v1183
        %v1185 = vpop.f32.mrb[0].mxu0
        %1186 = vdwg.mxu0
        %1187 = vrot.lane.b32.xlu0 %v662, 64
        %v1188 = vpop.permute.xlu0 %1187
        %v1191 = vsel %vm398, %v1033, 0
        %1193 = vmatprep.subr.mxu0 0.0
        %1194 = vmatpush1.msra.mxu0 %v1188
        %1195 = vmatprep.subr.mxu0 0.0
        %1196 = vmatpush1.msra.mxu0 0.0
        %1197 = vmatprep.subr.mxu0 0.0
        %1198 = vmatpush1.msra.mxu0 0.0
        %1199 = vmatprep.subr.mxu0 0.0
        %1200 = vmatpush1.msra.mxu0 0.0
        %1201 = vmatprep.subr.mxu0 0.0
        %1202 = vmatpush1.msra.mxu0 0.0
        %1203 = vmatprep.subr.mxu0 0.0
        %1204 = vmatpush1.msra.mxu0 0.0
        %1205 = vmatprep.subr.mxu0 0.0
        %1206 = vmatpush1.msra.mxu0 0.0
        %1207 = vmatprep.subr.mxu0 0.0
        %1208 = vmatpush1.msra.mxu0 0.0
        %1209 = vmatprep.subr.mxu0 0.0
        %1210 = vmatpush1.msra.mxu0 0.0
        %1211 = vmatprep.subr.mxu0 0.0
        %1212 = vmatpush1.msra.mxu0 0.0
        %1213 = vmatprep.subr.mxu0 0.0
        %1214 = vmatpush1.msra.mxu0 0.0
        %1215 = vmatprep.subr.mxu0 0.0
        %1216 = vmatpush1.msra.mxu0 0.0
        %1217 = vmatprep.subr.mxu0 0.0
        %1218 = vmatpush1.msra.mxu0 0.0
        %1219 = vmatprep.subr.mxu0 0.0
        %1220 = vmatpush1.msra.mxu0 0.0
        %1221 = vmatprep.subr.mxu0 0.0
        %1222 = vmatpush1.msra.mxu0 0.0
        %1223 = vmatprep.subr.mxu0 0.0
        %1224 = vmatpush1.msra.mxu0 0.0
        %1225 = vmatprep.subr.mxu0 0.0
        %1226 = vmatpush1.msra.mxu0 0.0
        %1227 = vmatprep.subr.mxu0 0.0
        %1228 = vmatpush1.msra.mxu0 0.0
        %1229 = vmatprep.subr.mxu0 0.0
        %1230 = vmatpush1.msra.mxu0 0.0
        %1231 = vmatprep.subr.mxu0 0.0
        %1232 = vmatpush1.msra.mxu0 0.0
        %1233 = vmatprep.subr.mxu0 0.0
        %1234 = vmatpush1.msra.mxu0 0.0
        %1235 = vmatprep.subr.mxu0 0.0
        %1236 = vmatpush1.msra.mxu0 0.0
        %1237 = vmatprep.subr.mxu0 0.0
        %1238 = vmatpush1.msra.mxu0 0.0
        %1239 = vmatprep.subr.mxu0 0.0
        %1240 = vmatpush1.msra.mxu0 0.0
        %1241 = vmatprep.subr.mxu0 0.0
        %1242 = vmatpush1.msra.mxu0 0.0
        %1243 = vmatprep.subr.mxu0 0.0
        %1244 = vmatpush1.msra.mxu0 0.0
        %1245 = vmatprep.subr.mxu0 0.0
        %1246 = vmatpush1.msra.mxu0 0.0
        %1247 = vmatprep.subr.mxu0 0.0
        %1248 = vmatpush1.msra.mxu0 0.0
        %1249 = vmatprep.subr.mxu0 0.0
        %1250 = vmatpush1.msra.mxu0 0.0
        %1251 = vmatprep.subr.mxu0 0.0
        %1252 = vmatpush1.msra.mxu0 0.0
        %1253 = vmatprep.subr.mxu0 0.0
        %1254 = vmatpush1.msra.mxu0 0.0
        %1255 = vmatprep.subr.mxu0 0.0
        %1256 = vmatpush1.msra.mxu0 0.0
        %1257 = vmatprep.mubr.f32.mxu0 0.0
        %1258 = vmatmul.mubr.f32.gmra.mrb[0].mxu0 %v1191
        %v1259 = vpop.f32.mrb[0].mxu0
        %v1260 = vadd.f32 0.0, %v1259
        %v1261 = vpop.f32.mrb[0].mxu0
        %1262 = vdwg.mxu0
        %1263 = vrot.lane.b32.xlu0 %v664, 64
        %v1264 = vpop.permute.xlu0 %1263
        %v1267 = vsel %vm398, %v1034, 0
        %1269 = vmatprep.subr.mxu0 0.0
        %1270 = vmatpush1.msra.mxu0 %v1264
        %1271 = vmatprep.subr.mxu0 0.0
        %1272 = vmatpush1.msra.mxu0 0.0
        %1273 = vmatprep.subr.mxu0 0.0
        %1274 = vmatpush1.msra.mxu0 0.0
        %1275 = vmatprep.subr.mxu0 0.0
        %1276 = vmatpush1.msra.mxu0 0.0
        %1277 = vmatprep.subr.mxu0 0.0
        %1278 = vmatpush1.msra.mxu0 0.0
        %1279 = vmatprep.subr.mxu0 0.0
        %1280 = vmatpush1.msra.mxu0 0.0
        %1281 = vmatprep.subr.mxu0 0.0
        %1282 = vmatpush1.msra.mxu0 0.0
        %1283 = vmatprep.subr.mxu0 0.0
        %1284 = vmatpush1.msra.mxu0 0.0
        %1285 = vmatprep.subr.mxu0 0.0
        %1286 = vmatpush1.msra.mxu0 0.0
        %1287 = vmatprep.subr.mxu0 0.0
        %1288 = vmatpush1.msra.mxu0 0.0
        %1289 = vmatprep.subr.mxu0 0.0
        %1290 = vmatpush1.msra.mxu0 0.0
        %1291 = vmatprep.subr.mxu0 0.0
        %1292 = vmatpush1.msra.mxu0 0.0
        %1293 = vmatprep.subr.mxu0 0.0
        %1294 = vmatpush1.msra.mxu0 0.0
        %1295 = vmatprep.subr.mxu0 0.0
        %1296 = vmatpush1.msra.mxu0 0.0
        %1297 = vmatprep.subr.mxu0 0.0
        %1298 = vmatpush1.msra.mxu0 0.0
        %1299 = vmatprep.subr.mxu0 0.0
        %1300 = vmatpush1.msra.mxu0 0.0
        %1301 = vmatprep.subr.mxu0 0.0
        %1302 = vmatpush1.msra.mxu0 0.0
        %1303 = vmatprep.subr.mxu0 0.0
        %1304 = vmatpush1.msra.mxu0 0.0
        %1305 = vmatprep.subr.mxu0 0.0
        %1306 = vmatpush1.msra.mxu0 0.0
        %1307 = vmatprep.subr.mxu0 0.0
        %1308 = vmatpush1.msra.mxu0 0.0
        %1309 = vmatprep.subr.mxu0 0.0
        %1310 = vmatpush1.msra.mxu0 0.0
        %1311 = vmatprep.subr.mxu0 0.0
        %1312 = vmatpush1.msra.mxu0 0.0
        %1313 = vmatprep.subr.mxu0 0.0
        %1314 = vmatpush1.msra.mxu0 0.0
        %1315 = vmatprep.subr.mxu0 0.0
        %1316 = vmatpush1.msra.mxu0 0.0
        %1317 = vmatprep.subr.mxu0 0.0
        %1318 = vmatpush1.msra.mxu0 0.0
        %1319 = vmatprep.subr.mxu0 0.0
        %1320 = vmatpush1.msra.mxu0 0.0
        %1321 = vmatprep.subr.mxu0 0.0
        %1322 = vmatpush1.msra.mxu0 0.0
        %1323 = vmatprep.subr.mxu0 0.0
        %1324 = vmatpush1.msra.mxu0 0.0
        %1325 = vmatprep.subr.mxu0 0.0
        %1326 = vmatpush1.msra.mxu0 0.0
        %1327 = vmatprep.subr.mxu0 0.0
        %1328 = vmatpush1.msra.mxu0 0.0
        %1329 = vmatprep.subr.mxu0 0.0
        %1330 = vmatpush1.msra.mxu0 0.0
        %1331 = vmatprep.subr.mxu0 0.0
        %1332 = vmatpush1.msra.mxu0 0.0
        %1333 = vmatprep.mubr.f32.mxu0 0.0
        %1334 = vmatmul.mubr.f32.gmra.mrb[0].mxu0 %v1267
        %v1335 = vpop.f32.mrb[0].mxu0
        %v1336 = vadd.f32 0.0, %v1335
        %v1337 = vpop.f32.mrb[0].mxu0
        %1338 = vdwg.mxu0
        %1340 = vrot.lane.b32.xlu0 %v1184, 8
        %v1341 = vpop.permute.xlu0 %1340
        %1344 = vrot.lane.b32.xlu0 %v1260, 16
        %v1345 = vpop.permute.xlu0 %1344
        %1348 = vrot.lane.b32.xlu0 %v1336, 24
        %v1349 = vpop.permute.xlu0 %1348
        %v1351 = vsel %vm398, %v1108, %v1341
        %vm1352 = vcmask 130048
        %v1353 = vsel %vm1352, %v1351, %v1345
        %vm1354 = vcmask 195584
        %v1355 = vsel %vm1354, %v1353, %v1349
        %v1356 = vlaneseq
        %v1357 = vshrl.u32 %v1356, 7
        %v1358 = vsub.s32 6, %v1357
        %v1359 = vrot.slane %v198, %v1358
        %1364 = vrot.lane.b32.xlu0 %v194, 32
        %v1365 = vpop.permute.xlu0 %1364
        %1366 = vrot.lane.b32.xlu0 %v195, 32
        %v1367 = vpop.permute.xlu0 %1366
        %1368 = vrot.lane.b32.xlu0 %v196, 32
        %v1369 = vpop.permute.xlu0 %1368
        %1370 = vrot.lane.b32.xlu0 %v197, 32
        %v1371 = vpop.permute.xlu0 %1370
        %v1377 = vsel %vm263, %v1355, 0
        %1379 = vmatprep.subr.mxu0 0.0
        %1380 = vmatpush1.msra.mxu0 %v1365
        %1381 = vmatprep.subr.mxu0 0.0
        %1382 = vmatpush1.msra.mxu0 %v1367
        %1383 = vmatprep.subr.mxu0 0.0
        %1384 = vmatpush1.msra.mxu0 %v1369
        %1385 = vmatprep.subr.mxu0 0.0
        %1386 = vmatpush1.msra.mxu0 %v1371
        %1387 = vmatprep.subr.mxu0 0.0
        %1388 = vmatpush1.msra.mxu0 0.0
        %1389 = vmatprep.subr.mxu0 0.0
        %1390 = vmatpush1.msra.mxu0 0.0
        %1391 = vmatprep.subr.mxu0 0.0
        %1392 = vmatpush1.msra.mxu0 0.0
        %1393 = vmatprep.subr.mxu0 0.0
        %1394 = vmatpush1.msra.mxu0 0.0
        %1395 = vmatprep.subr.mxu0 0.0
        %1396 = vmatpush1.msra.mxu0 0.0
        %1397 = vmatprep.subr.mxu0 0.0
        %1398 = vmatpush1.msra.mxu0 0.0
        %1399 = vmatprep.subr.mxu0 0.0
        %1400 = vmatpush1.msra.mxu0 0.0
        %1401 = vmatprep.subr.mxu0 0.0
        %1402 = vmatpush1.msra.mxu0 0.0
        %1403 = vmatprep.subr.mxu0 0.0
        %1404 = vmatpush1.msra.mxu0 0.0
        %1405 = vmatprep.subr.mxu0 0.0
        %1406 = vmatpush1.msra.mxu0 0.0
        %1407 = vmatprep.subr.mxu0 0.0
        %1408 = vmatpush1.msra.mxu0 0.0
        %1409 = vmatprep.subr.mxu0 0.0
        %1410 = vmatpush1.msra.mxu0 0.0
        %1411 = vmatprep.subr.mxu0 0.0
        %1412 = vmatpush1.msra.mxu0 0.0
        %1413 = vmatprep.subr.mxu0 0.0
        %1414 = vmatpush1.msra.mxu0 0.0
        %1415 = vmatprep.subr.mxu0 0.0
        %1416 = vmatpush1.msra.mxu0 0.0
        %1417 = vmatprep.subr.mxu0 0.0
        %1418 = vmatpush1.msra.mxu0 0.0
        %1419 = vmatprep.subr.mxu0 0.0
        %1420 = vmatpush1.msra.mxu0 0.0
        %1421 = vmatprep.subr.mxu0 0.0
        %1422 = vmatpush1.msra.mxu0 0.0
        %1423 = vmatprep.subr.mxu0 0.0
        %1424 = vmatpush1.msra.mxu0 0.0
        %1425 = vmatprep.subr.mxu0 0.0
        %1426 = vmatpush1.msra.mxu0 0.0
        %1427 = vmatprep.subr.mxu0 0.0
        %1428 = vmatpush1.msra.mxu0 0.0
        %1429 = vmatprep.subr.mxu0 0.0
        %1430 = vmatpush1.msra.mxu0 0.0
        %1431 = vmatprep.subr.mxu0 0.0
        %1432 = vmatpush1.msra.mxu0 0.0
        %1433 = vmatprep.subr.mxu0 0.0
        %1434 = vmatpush1.msra.mxu0 0.0
        %1435 = vmatprep.subr.mxu0 0.0
        %1436 = vmatpush1.msra.mxu0 0.0
        %1437 = vmatprep.subr.mxu0 0.0
        %1438 = vmatpush1.msra.mxu0 0.0
        %1439 = vmatprep.subr.mxu0 0.0
        %1440 = vmatpush1.msra.mxu0 0.0
        %1441 = vmatprep.subr.mxu0 0.0
        %1442 = vmatpush1.msra.mxu0 0.0
        %1443 = vmatprep.mubr.f32.mxu0 0.0
        %1444 = vmatmul.mubr.f32.gmra.mrb[0].mxu0 %v1377
        %v1445 = vpop.f32.mrb[0].mxu0
        %v1446 = vadd.f32 %v1359, %v1445
        %v1447 = vpop.f32.mrb[0].mxu0
        %1448 = vdwg.mxu0
        %1449 = vst.msk [vmem:[%s188] sm:$0xff] %vm263, %v1446
        %s1450 = sand.u32 %s115, 1
        %s1451 = scalar_lea.sflag [#allocation3], %s1450
        %s1452 = sand.u32 %s115, 1
        %s1453 = smul.addr %s1452, 8
        %s1454 = scalar_lea.vmem [#allocation2], %s1453
        // Predicated region
        $region37: #{mhsa_pallas.1} parent=35 // pred_check
          %p1455 = pneg %p125
        $region38: #{mhsa_pallas.1} parent=35 // pred_check_branch
          %1457 = sbr.rel (%p1455) target = $region40
        $region39: #{mhsa_pallas.1} parent=35 // pred_region
          %s1459 = ssub.s32 128, 128
          %1460 = vsyncadd %s1451, %s1459
          %s1461 = smul.addr %s18, 128
          %s1462 = scalar_lea.hbm %s4, %s1461
          %s1464 = sshll.u32 %s1454, 4
          %s1465 = int_to_ptr.vmem [resolvable:$true] %s1464
          %1467 = dma.vmem_to_hbm [thread:$0]  %s1465, 128, %s1462, %s1451
        $region40: #{mhsa_pallas.1} parent=35 // pred_fallthru
          _
      $region36: #{mhsa_pallas.1} parent=5 // pred_fallthru
        _
      %p1468 = scmp.le.s32.totalorder 2, %s13
      // Predicated region
      $region41: #{mhsa_pallas.1} parent=5 // pred_check
        %p1469 = pneg %p1468
      $region42: #{mhsa_pallas.1} parent=5 // pred_check_branch
        %1471 = sbr.rel (%p1469) target = $region44
      $region43: #{mhsa_pallas.1} parent=5 // pred_region
        %s1472 = ssub.s32 %s13, 2
        // Predicated region
        $region45: #{mhsa_pallas.1} parent=43 // pred_check
          %p1473 = pneg %p131
        $region46: #{mhsa_pallas.1} parent=43 // pred_check_branch
          %1475 = sbr.rel (%p1473) target = $region48
        $region47: #{mhsa_pallas.1} parent=43 // pred_region
          %s1476 = sand.u32 %s116, 1
          %s1477 = scalar_lea.sflag [#allocation3], %s1476
          %s1478 = sand.u32 %s116, 1
          %s1479 = smul.addr %s1478, 8
          %s1480 = scalar_lea.vmem [#allocation2], %s1479
          %1481 = dma.done %s1477, 128
        $region48: #{mhsa_pallas.1} parent=43 // pred_fallthru
          _
      $region44: #{mhsa_pallas.1} parent=5 // pred_fallthru
        _
    $region6: #{mhsa_pallas.1} parent=1 // loop_footer
      %s17 = sadd.s32 1, %s13
    $region7: #{mhsa_pallas.1} parent=1 // loop_footer_branch
      %12 = sbr.rel target = $region3
    $region8: #{mhsa_pallas.1} parent=1 // loop_exit
      _
    %1482 = vsyncpa [#allocation3], 1
    %s1483 = scalar_lea.sflag [#allocation3], 1
    %1484 = vsyncpa %s1483, 1

</llo_original>
